<compile_context>
chip_gen: v7x
topology: tpu7x:2x2x1
jax: 0.10.0
libtpu: 0.0.40
codegen_flags: <defaults>
</compile_context>

<pallas_src>
import jax
import jax.numpy as jnp
from jax.experimental import pallas as pl
from jax.experimental.pallas import tpu as pltpu

LATENT = 10
HIDDEN = 256
OUTPUT = 48
LAYERS_PER_BLOCK = 2   # fixed in the kernel body below
NUM_BLOCKS = 1


def _fc_gan_kernel(x_ref, w_in_ref, b_in_ref,
                   w_b1_ref, b_b1_ref, w_b2_ref, b_b2_ref,
                   w_out_ref, b_out_ref, o_ref):
    # Input layer: (TM, LATENT) @ (LATENT, HIDDEN) + b -> ReLU.
    # Weights are bf16; activations are cast to bf16 only at the MXU input,
    # accumulation and all VPU math (bias, ReLU, residual) stay f32.
    # (K=10 underfills the MXU but is <1% of the kernel; intentionally untouched.)
    x = x_ref[...].astype(jnp.bfloat16)
    h = jnp.dot(x, w_in_ref[...], preferred_element_type=jnp.float32)
    h = jnp.maximum(h + b_in_ref[...], 0.0)

    # One residual block with two FC layers (ReLU between), skip-add, ReLU.
    r = jnp.dot(h.astype(jnp.bfloat16), w_b1_ref[...],
                preferred_element_type=jnp.float32)
    r = jnp.maximum(r + b_b1_ref[...], 0.0)
    r = jnp.dot(r.astype(jnp.bfloat16), w_b2_ref[...],
                preferred_element_type=jnp.float32)
    r = r + b_b2_ref[...]
    h = jnp.maximum(h + r, 0.0)

    # Task head 0: (TM, HIDDEN) @ (HIDDEN, OUTPUT) + b, written directly at
    # 48 lanes (no 128-lane padding, no post-kernel slice copy).
    out = jnp.dot(h.astype(jnp.bfloat16), w_out_ref[...],
                  preferred_element_type=jnp.float32)
    o_ref[...] = (out + b_out_ref[...]).astype(o_ref.dtype)


def _choose_tile(B):
    """Pick (tm, B_pad).

    Policy (per review): tile rows are a multiple of 256 so the 256-wide MXU on
    v6e/v7x is filled; a single grid step for tiny batches (per-step overhead
    dominates the ~42 MFLOP of work per 256 rows); two even tiles once the
    batch allows it so v7x's two TensorCores both get work; cap at 1024 rows to
    bound the f32 intermediate size (~1 MiB each).
    """
    def _round_up(n, m):
        return ((n + m - 1) // m) * m

    b256 = max(256, _round_up(B, 256))
    if b256 <= 256:
        tm = 256                      # single step
    elif b256 <= 2048:
        tm = _round_up(b256 // 2, 256)  # 2 even tiles -> both v7x TCs busy
    else:
        tm = 1024
    return tm, _round_up(B, tm)


def fc_generator(x, params, *, tm=None):
    """x: (B, LATENT) float32 -> (B, OUTPUT) float32.

    params: bf16 weights / f32 biases from prepare_params().
    """
    w_in, b_in, w_b1, b_b1, w_b2, b_b2, w_out, b_out = params
    B = x.shape[0]
    if tm is None:
        tm, B_pad = _choose_tile(B)
    else:
        B_pad = pl.cdiv(B, tm) * tm
    if B_pad != B:
        x = jnp.pad(x, ((0, B_pad - B), (0, 0)))
    nb = B_pad // tm

    vmem = pltpu.MemorySpace.VMEM

    def tiled(shape):
        # Batch-tiled operand: new block per grid step (pipelined DMA).
        return pl.BlockSpec(shape, lambda i: (i, 0), memory_space=vmem)

    def resident(shape):
        # Whole-array block with a constant index map: fetched once, stays
        # VMEM-resident across all grid steps (~293 KB bf16 of weights total).
        return pl.BlockSpec(shape, lambda i: (0, 0), memory_space=vmem)

    out = pl.pallas_call(
        _fc_gan_kernel,
        out_shape=jax.ShapeDtypeStruct((B_pad, OUTPUT), jnp.float32),
        grid=(nb,),
        in_specs=[
            tiled((tm, LATENT)),
            resident(w_in.shape), resident(b_in.shape),
            resident(w_b1.shape), resident(b_b1.shape),
            resident(w_b2.shape), resident(b_b2.shape),
            resident(w_out.shape), resident(b_out.shape),
        ],
        out_specs=tiled((tm, OUTPUT)),
        compiler_params=pltpu.CompilerParams(
            dimension_semantics=("parallel",)),  # v7x: split batch tiles over 2 TCs
    )(x, w_in, b_in, w_b1, b_b1, w_b2, b_b2, w_out, b_out)

    # Only slice when the batch had to be padded; at typical batch sizes
    # (multiples of 256) this is the kernel output with zero extra HBM copies.
    return out if B_pad == B else out[:B]


def init_params(key):
    """Deterministic f32 parameter init. Weight layout: (in_features, out_features)."""
    ks = jax.random.split(key, 4)

    def linear(k, fan_in, fan_out):
        scale = 1.0 / jnp.sqrt(jnp.float32(fan_in))
        w = jax.random.uniform(k, (fan_in, fan_out), jnp.float32, -scale, scale)
        b = jnp.zeros((1, fan_out), jnp.float32)
        return w, b

    w_in, b_in = linear(ks[0], LATENT, HIDDEN)
    w_b1, b_b1 = linear(ks[1], HIDDEN, HIDDEN)
    w_b2, b_b2 = linear(ks[2], HIDDEN, HIDDEN)
    w_out, b_out = linear(ks[3], HIDDEN, OUTPUT)
    return (w_in, b_in, w_b1, b_b1, w_b2, b_b2, w_out, b_out)


def prepare_params(params_f32):
    """Cast weights to bf16 (biases stay f32)."""
    w_in, b_in, w_b1, b_b1, w_b2, b_b2, w_out, b_out = params_f32
    bf = jnp.bfloat16
    return (w_in.astype(bf), b_in,
            w_b1.astype(bf), b_b1,
            w_b2.astype(bf), b_b2,
            w_out.astype(bf), b_out)


def _reference(x, params_f32):
    """Pure-JAX reference emulating the kernel's bf16-input / f32-accumulate matmuls."""
    def bdot(a, w):
        a16 = a.astype(jnp.bfloat16).astype(jnp.float32)
        w16 = w.astype(jnp.bfloat16).astype(jnp.float32)
        return jnp.dot(a16, w16, precision=jax.lax.Precision.HIGHEST)

    w_in, b_in, w_b1, b_b1, w_b2, b_b2, w_out, b_out = params_f32
    h = jnp.maximum(bdot(x, w_in) + b_in, 0.0)
    r = jnp.maximum(bdot(h, w_b1) + b_b1, 0.0)
    r = bdot(r, w_b2) + b_b2
    h = jnp.maximum(h + r, 0.0)
    return bdot(h, w_out) + b_out


if __name__ == "__main__":
    key = jax.random.PRNGKey(0)
    k_x, k_p = jax.random.split(key)

    # B=512 -> tm=256, 2 grid steps: fills 256-wide MXU rows (v6e/v7x), gives
    # one tile per TensorCore on v7x, and needs no batch padding / post-slice.
    B = 512
    x = jax.random.normal(k_x, (B, LATENT), jnp.float32)

    params_f32 = init_params(k_p)
    params = prepare_params(params_f32)

    out = fc_generator(x, params)
    out = jax.block_until_ready(out)

    ref = _reference(x, params_f32)
    assert out.shape == (B, OUTPUT), out.shape
    assert jnp.allclose(out, ref, atol=1e-2, rtol=1e-2), (
        "mismatch vs reference: max abs diff = %s" % jnp.max(jnp.abs(out - ref)))

    print("KERNEL_OK")
</pallas_src>

<mosaic_0001>
module attributes {stable_mosaic.version = 11 : i64} {
  func.func @_fc_gan_kernel(%arg0: i32, %arg1: memref<256x10xf32, #tpu.memory_space<vmem>>, %arg2: memref<10x256xbf16, #tpu.memory_space<vmem>>, %arg3: memref<1x256xf32, #tpu.memory_space<vmem>>, %arg4: memref<256x256xbf16, #tpu.memory_space<vmem>>, %arg5: memref<1x256xf32, #tpu.memory_space<vmem>>, %arg6: memref<256x256xbf16, #tpu.memory_space<vmem>>, %arg7: memref<1x256xf32, #tpu.memory_space<vmem>>, %arg8: memref<256x48xbf16, #tpu.memory_space<vmem>>, %arg9: memref<1x48xf32, #tpu.memory_space<vmem>>, %arg10: memref<256x48xf32, #tpu.memory_space<vmem>>) attributes {dimension_semantics = [#tpu.dimension_semantics<parallel>], iteration_bounds = array<i64: 2>, scalar_prefetch = 0 : i64, scratch_operands = 0 : i64, tpu.core_type = #tpu.core_type<tc>, window_params = [{transform_indices = @transform_0, window_bounds = array<i64: 256, 10>}, {pipeline_mode = #tpu.pipeline_mode<synchronous>, transform_indices = @transform_1, window_bounds = array<i64: 10, 256>}, {pipeline_mode = #tpu.pipeline_mode<synchronous>, transform_indices = @transform_2, window_bounds = array<i64: 1, 256>}, {pipeline_mode = #tpu.pipeline_mode<synchronous>, transform_indices = @transform_3, window_bounds = array<i64: 256, 256>}, {pipeline_mode = #tpu.pipeline_mode<synchronous>, transform_indices = @transform_4, window_bounds = array<i64: 1, 256>}, {pipeline_mode = #tpu.pipeline_mode<synchronous>, transform_indices = @transform_5, window_bounds = array<i64: 256, 256>}, {pipeline_mode = #tpu.pipeline_mode<synchronous>, transform_indices = @transform_6, window_bounds = array<i64: 1, 256>}, {pipeline_mode = #tpu.pipeline_mode<synchronous>, transform_indices = @transform_7, window_bounds = array<i64: 256, 48>}, {pipeline_mode = #tpu.pipeline_mode<synchronous>, transform_indices = @transform_8, window_bounds = array<i64: 1, 48>}, {transform_indices = @transform_9, window_bounds = array<i64: 256, 48>}]} {
    %c0 = arith.constant 0 : index
    %c0_0 = arith.constant 0 : index
    %0 = vector.load %arg1[%c0, %c0_0] : memref<256x10xf32, #tpu.memory_space<vmem>>, vector<256x10xf32>
    %1 = arith.truncf %0 : vector<256x10xf32> to vector<256x10xbf16>
    %c0_1 = arith.constant 0 : index
    %c0_2 = arith.constant 0 : index
    %2 = vector.load %arg2[%c0_1, %c0_2] : memref<10x256xbf16, #tpu.memory_space<vmem>>, vector<10x256xbf16>
    %cst = arith.constant dense<0.000000e+00> : vector<256x256xf32>
    %3 = tpu.matmul %1, %2, %cst {dimension_numbers = #tpu.dot_dimension_numbers<[1], [0], [0], [1], [0, 0, 1, 1], [], []>} : vector<256x10xbf16>, vector<10x256xbf16>, vector<256x256xf32> -> vector<256x256xf32>
    %c0_3 = arith.constant 0 : index
    %c0_4 = arith.constant 0 : index
    %4 = vector.load %arg3[%c0_3, %c0_4] : memref<1x256xf32, #tpu.memory_space<vmem>>, vector<1x256xf32>
    %5 = vector.broadcast %4 : vector<1x256xf32> to vector<256x256xf32>
    %6 = arith.addf %3, %5 : vector<256x256xf32>
    %cst_5 = arith.constant 0.000000e+00 : f32
    %7 = vector.broadcast %cst_5 : f32 to vector<256x256xf32>
    %8 = arith.maximumf %6, %7 : vector<256x256xf32>
    %9 = arith.truncf %8 : vector<256x256xf32> to vector<256x256xbf16>
    %c0_6 = arith.constant 0 : index
    %c0_7 = arith.constant 0 : index
    %10 = vector.load %arg4[%c0_6, %c0_7] : memref<256x256xbf16, #tpu.memory_space<vmem>>, vector<256x256xbf16>
    %cst_8 = arith.constant dense<0.000000e+00> : vector<256x256xf32>
    %11 = tpu.matmul %9, %10, %cst_8 {dimension_numbers = #tpu.dot_dimension_numbers<[1], [0], [0], [1], [0, 0, 1, 1], [], []>} : vector<256x256xbf16>, vector<256x256xbf16>, vector<256x256xf32> -> vector<256x256xf32>
    %c0_9 = arith.constant 0 : index
    %c0_10 = arith.constant 0 : index
    %12 = vector.load %arg5[%c0_9, %c0_10] : memref<1x256xf32, #tpu.memory_space<vmem>>, vector<1x256xf32>
    %13 = vector.broadcast %12 : vector<1x256xf32> to vector<256x256xf32>
    %14 = arith.addf %11, %13 : vector<256x256xf32>
    %cst_11 = arith.constant 0.000000e+00 : f32
    %15 = vector.broadcast %cst_11 : f32 to vector<256x256xf32>
    %16 = arith.maximumf %14, %15 : vector<256x256xf32>
    %17 = arith.truncf %16 : vector<256x256xf32> to vector<256x256xbf16>
    %c0_12 = arith.constant 0 : index
    %c0_13 = arith.constant 0 : index
    %18 = vector.load %arg6[%c0_12, %c0_13] : memref<256x256xbf16, #tpu.memory_space<vmem>>, vector<256x256xbf16>
    %cst_14 = arith.constant dense<0.000000e+00> : vector<256x256xf32>
    %19 = tpu.matmul %17, %18, %cst_14 {dimension_numbers = #tpu.dot_dimension_numbers<[1], [0], [0], [1], [0, 0, 1, 1], [], []>} : vector<256x256xbf16>, vector<256x256xbf16>, vector<256x256xf32> -> vector<256x256xf32>
    %c0_15 = arith.constant 0 : index
    %c0_16 = arith.constant 0 : index
    %20 = vector.load %arg7[%c0_15, %c0_16] : memref<1x256xf32, #tpu.memory_space<vmem>>, vector<1x256xf32>
    %21 = vector.broadcast %20 : vector<1x256xf32> to vector<256x256xf32>
    %22 = arith.addf %19, %21 : vector<256x256xf32>
    %23 = arith.addf %8, %22 : vector<256x256xf32>
    %cst_17 = arith.constant 0.000000e+00 : f32
    %24 = vector.broadcast %cst_17 : f32 to vector<256x256xf32>
    %25 = arith.maximumf %23, %24 : vector<256x256xf32>
    %26 = arith.truncf %25 : vector<256x256xf32> to vector<256x256xbf16>
    %c0_18 = arith.constant 0 : index
    %c0_19 = arith.constant 0 : index
    %27 = vector.load %arg8[%c0_18, %c0_19] : memref<256x48xbf16, #tpu.memory_space<vmem>>, vector<256x48xbf16>
    %cst_20 = arith.constant dense<0.000000e+00> : vector<256x48xf32>
    %28 = tpu.matmul %26, %27, %cst_20 {dimension_numbers = #tpu.dot_dimension_numbers<[1], [0], [0], [1], [0, 0, 1, 1], [], []>} : vector<256x256xbf16>, vector<256x48xbf16>, vector<256x48xf32> -> vector<256x48xf32>
    %c0_21 = arith.constant 0 : index
    %c0_22 = arith.constant 0 : index
    %29 = vector.load %arg9[%c0_21, %c0_22] : memref<1x48xf32, #tpu.memory_space<vmem>>, vector<1x48xf32>
    %30 = vector.broadcast %29 : vector<1x48xf32> to vector<256x48xf32>
    %31 = arith.addf %28, %30 : vector<256x48xf32>
    %c0_23 = arith.constant 0 : index
    %c0_24 = arith.constant 0 : index
    %32 = vector.load %arg10[%c0_23, %c0_24] : memref<256x48xf32, #tpu.memory_space<vmem>>, vector<256x48xf32>
    tpu.vector_store %arg10[%c0_23, %c0_24], %31 {strides = array<i32>} : memref<256x48xf32, #tpu.memory_space<vmem>>, vector<256x48xf32>,
    return
  }
  func.func @transform_0(%arg0: i32) -> (i32, i32) {
    %c0_i32 = arith.constant 0 : i32
    %c0_i32_0 = arith.constant 0 : i32
    return %arg0, %c0_i32 : i32, i32
  }
  func.func @transform_1(%arg0: i32) -> (i32, i32) {
    %c0_i32 = arith.constant 0 : i32
    %c0_i32_0 = arith.constant 0 : i32
    %c0_i32_1 = arith.constant 0 : i32
    return %c0_i32, %c0_i32_0 : i32, i32
  }
  func.func @transform_2(%arg0: i32) -> (i32, i32) {
    %c0_i32 = arith.constant 0 : i32
    %c0_i32_0 = arith.constant 0 : i32
    %c0_i32_1 = arith.constant 0 : i32
    return %c0_i32, %c0_i32_0 : i32, i32
  }
  func.func @transform_3(%arg0: i32) -> (i32, i32) {
    %c0_i32 = arith.constant 0 : i32
    %c0_i32_0 = arith.constant 0 : i32
    %c0_i32_1 = arith.constant 0 : i32
    return %c0_i32, %c0_i32_0 : i32, i32
  }
  func.func @transform_4(%arg0: i32) -> (i32, i32) {
    %c0_i32 = arith.constant 0 : i32
    %c0_i32_0 = arith.constant 0 : i32
    %c0_i32_1 = arith.constant 0 : i32
    return %c0_i32, %c0_i32_0 : i32, i32
  }
  func.func @transform_5(%arg0: i32) -> (i32, i32) {
    %c0_i32 = arith.constant 0 : i32
    %c0_i32_0 = arith.constant 0 : i32
    %c0_i32_1 = arith.constant 0 : i32
    return %c0_i32, %c0_i32_0 : i32, i32
  }
  func.func @transform_6(%arg0: i32) -> (i32, i32) {
    %c0_i32 = arith.constant 0 : i32
    %c0_i32_0 = arith.constant 0 : i32
    %c0_i32_1 = arith.constant 0 : i32
    return %c0_i32, %c0_i32_0 : i32, i32
  }
  func.func @transform_7(%arg0: i32) -> (i32, i32) {
    %c0_i32 = arith.constant 0 : i32
    %c0_i32_0 = arith.constant 0 : i32
    %c0_i32_1 = arith.constant 0 : i32
    return %c0_i32, %c0_i32_0 : i32, i32
  }
  func.func @transform_8(%arg0: i32) -> (i32, i32) {
    %c0_i32 = arith.constant 0 : i32
    %c0_i32_0 = arith.constant 0 : i32
    %c0_i32_1 = arith.constant 0 : i32
    return %c0_i32, %c0_i32_0 : i32, i32
  }
  func.func @transform_9(%arg0: i32) -> (i32, i32) {
    %c0_i32 = arith.constant 0 : i32
    %c0_i32_0 = arith.constant 0 : i32
    return %arg0, %c0_i32 : i32, i32
  }
}

</mosaic_0001>

<llo_original>
// kernel: tpu_custom_call.1
$region0: #{tpu_custom_call.1}
  #allocation0 [shape = 'u32[]', space=smem, size = 0x4, offset = 0x4, fixed_abs, tag = 'smem constant byte address 0x4 - core index']
  #allocation1 [shape = 'u32[144,128]{1,0:T(1,128)}', space=vmem, size = 0x12000, scoped, tag = 'internal scratch']
  %s0 = inlined_call_operand.vmem [shape: f32[512,10], index: 0, kind: input, shape index: {}]
  %s1 = inlined_call_operand.vmem [shape: bf16[10,256], index: 1, kind: input, shape index: {}]
  %s2 = inlined_call_operand.vmem [shape: f32[1,256], index: 2, kind: input, shape index: {}]
  %s3 = inlined_call_operand.vmem [shape: bf16[256,256], index: 3, kind: input, shape index: {}]
  %s4 = inlined_call_operand.vmem [shape: f32[1,256], index: 4, kind: input, shape index: {}]
  %s5 = inlined_call_operand.vmem [shape: bf16[256,256], index: 5, kind: input, shape index: {}]
  %s6 = inlined_call_operand.vmem [shape: f32[1,256], index: 6, kind: input, shape index: {}]
  %s7 = inlined_call_operand.vmem [shape: bf16[256,48], index: 7, kind: input, shape index: {}]
  %s8 = inlined_call_operand.vmem [shape: f32[1,48], index: 8, kind: input, shape index: {}]
  %s9 = inlined_call_operand.vmem [shape: f32[512,48], index: 9, kind: output, shape index: {}]
  %s10 = sld [smem:[#allocation0]]
  $region69: #{tpu_custom_call.1} parent=0
    _
  %s12 = ssub.s32 1, %s10
  %s13 = scalar_select 0, %s12, %s10
  loop: start=0, step=1, limit=4
  $region2: #{tpu_custom_call.1} parent=0 // loop_pre_header
    _
  $region3: #{tpu_custom_call.1} parent=0 // loop_header
    %s15 = sphi 0, %s19
    %p16 = scmp.ge.s32.totalorder %s15, 4
    %s25 = sphi 0, %s27
    %s28 = sphi 0, %s25
    %s29 = sphi 0, %s28
    %s45 = sphi 0, %s29
    %s49 = sphi 0, %s49
    %s51 = sphi 0, %s49
    %s52 = sphi 0, %s51
    %s66 = sphi 0, %s52
    %s70 = sphi 0, %s70
    %s72 = sphi 0, %s70
    %s73 = sphi 0, %s72
    %s87 = sphi 0, %s73
    %s91 = sphi 0, %s91
    %s93 = sphi 0, %s91
    %s94 = sphi 0, %s93
    %s108 = sphi 0, %s94
    %s112 = sphi 0, %s112
    %s114 = sphi 0, %s112
    %s115 = sphi 0, %s114
    %s129 = sphi 0, %s115
    %s133 = sphi 0, %s133
    %s135 = sphi 0, %s133
    %s136 = sphi 0, %s135
    %s150 = sphi 0, %s136
    %s154 = sphi 0, %s154
    %s156 = sphi 0, %s154
    %s157 = sphi 0, %s156
    %s171 = sphi 0, %s157
    %s175 = sphi 0, %s175
    %s177 = sphi 0, %s175
    %s178 = sphi 0, %s177
    %s192 = sphi 0, %s178
    %s196 = sphi 0, %s196
    %s198 = sphi 0, %s196
    %s199 = sphi 0, %s198
    %s213 = sphi 0, %s199
    %s219 = sphi 0, %s221
    %s222 = sphi 0, %s219
    %s223 = sphi 0, %s222
    %s239 = sphi 0, %s223
  $region4: #{tpu_custom_call.1} parent=0 // loop_header_branch
    %18 = sbr.rel (%p16) target = $region8
  $region5: #{tpu_custom_call.1} parent=0 // loop_body
    %s20 = ssub.s32 %s15, 1
    %s21 = ssub.s32 %s15, 2
    %s22 = sadd.s32 %s15, 1
    %s23 = ssub.s32 %s15, %s22
    %p24 = scmp.eq.s32.totalorder %s23, 0
    %s26 = sadd.s32 %s25, 1
    %s27 = scalar_select %p24, %s25, %s26
    %p30 = pneg %p24
    %p31 = scmp.eq.s32.totalorder %s15, 1
    %p32 = por %p30, %p31
    %p33 = scmp.ne.s32.totalorder %s25, %s28
    %p34 = scmp.eq.s32.totalorder %s15, 0
    %p35 = por %p33, %p34
    %p36 = scmp.ne.s32.totalorder %s25, %s28
    %p37 = scmp.eq.s32.totalorder %s20, 1
    %p38 = por %p36, %p37
    %p39 = scmp.ne.s32.totalorder %s28, %s29
    %p40 = scmp.eq.s32.totalorder %s20, 0
    %p41 = por %p39, %p40
    %p42 = scmp.ne.s32.totalorder %s28, %s29
    %p43 = scmp.eq.s32.totalorder %s21, 1
    %p44 = por %p42, %p43
    %p46 = scmp.ne.s32.totalorder %s29, %s45
    %p47 = scmp.eq.s32.totalorder %s21, 0
    %p48 = por %p46, %p47
    %s50 = sadd.s32 %s49, 1
    %p53 = scmp.eq.s32.totalorder %s15, 1
    %p54 = scmp.ne.s32.totalorder %s49, %s51
    %p55 = scmp.eq.s32.totalorder %s15, 0
    %p56 = por %p54, %p55
    %p57 = scmp.ne.s32.totalorder %s49, %s51
    %p58 = scmp.eq.s32.totalorder %s20, 1
    %p59 = por %p57, %p58
    %p60 = scmp.ne.s32.totalorder %s51, %s52
    %p61 = scmp.eq.s32.totalorder %s20, 0
    %p62 = por %p60, %p61
    %p63 = scmp.ne.s32.totalorder %s51, %s52
    %p64 = scmp.eq.s32.totalorder %s21, 1
    %p65 = por %p63, %p64
    %p67 = scmp.ne.s32.totalorder %s52, %s66
    %p68 = scmp.eq.s32.totalorder %s21, 0
    %p69 = por %p67, %p68
    %s71 = sadd.s32 %s70, 1
    %p74 = scmp.eq.s32.totalorder %s15, 1
    %p75 = scmp.ne.s32.totalorder %s70, %s72
    %p76 = scmp.eq.s32.totalorder %s15, 0
    %p77 = por %p75, %p76
    %p78 = scmp.ne.s32.totalorder %s70, %s72
    %p79 = scmp.eq.s32.totalorder %s20, 1
    %p80 = por %p78, %p79
    %p81 = scmp.ne.s32.totalorder %s72, %s73
    %p82 = scmp.eq.s32.totalorder %s20, 0
    %p83 = por %p81, %p82
    %p84 = scmp.ne.s32.totalorder %s72, %s73
    %p85 = scmp.eq.s32.totalorder %s21, 1
    %p86 = por %p84, %p85
    %p88 = scmp.ne.s32.totalorder %s73, %s87
    %p89 = scmp.eq.s32.totalorder %s21, 0
    %p90 = por %p88, %p89
    %s92 = sadd.s32 %s91, 1
    %p95 = scmp.eq.s32.totalorder %s15, 1
    %p96 = scmp.ne.s32.totalorder %s91, %s93
    %p97 = scmp.eq.s32.totalorder %s15, 0
    %p98 = por %p96, %p97
    %p99 = scmp.ne.s32.totalorder %s91, %s93
    %p100 = scmp.eq.s32.totalorder %s20, 1
    %p101 = por %p99, %p100
    %p102 = scmp.ne.s32.totalorder %s93, %s94
    %p103 = scmp.eq.s32.totalorder %s20, 0
    %p104 = por %p102, %p103
    %p105 = scmp.ne.s32.totalorder %s93, %s94
    %p106 = scmp.eq.s32.totalorder %s21, 1
    %p107 = por %p105, %p106
    %p109 = scmp.ne.s32.totalorder %s94, %s108
    %p110 = scmp.eq.s32.totalorder %s21, 0
    %p111 = por %p109, %p110
    %s113 = sadd.s32 %s112, 1
    %p116 = scmp.eq.s32.totalorder %s15, 1
    %p117 = scmp.ne.s32.totalorder %s112, %s114
    %p118 = scmp.eq.s32.totalorder %s15, 0
    %p119 = por %p117, %p118
    %p120 = scmp.ne.s32.totalorder %s112, %s114
    %p121 = scmp.eq.s32.totalorder %s20, 1
    %p122 = por %p120, %p121
    %p123 = scmp.ne.s32.totalorder %s114, %s115
    %p124 = scmp.eq.s32.totalorder %s20, 0
    %p125 = por %p123, %p124
    %p126 = scmp.ne.s32.totalorder %s114, %s115
    %p127 = scmp.eq.s32.totalorder %s21, 1
    %p128 = por %p126, %p127
    %p130 = scmp.ne.s32.totalorder %s115, %s129
    %p131 = scmp.eq.s32.totalorder %s21, 0
    %p132 = por %p130, %p131
    %s134 = sadd.s32 %s133, 1
    %p137 = scmp.eq.s32.totalorder %s15, 1
    %p138 = scmp.ne.s32.totalorder %s133, %s135
    %p139 = scmp.eq.s32.totalorder %s15, 0
    %p140 = por %p138, %p139
    %p141 = scmp.ne.s32.totalorder %s133, %s135
    %p142 = scmp.eq.s32.totalorder %s20, 1
    %p143 = por %p141, %p142
    %p144 = scmp.ne.s32.totalorder %s135, %s136
    %p145 = scmp.eq.s32.totalorder %s20, 0
    %p146 = por %p144, %p145
    %p147 = scmp.ne.s32.totalorder %s135, %s136
    %p148 = scmp.eq.s32.totalorder %s21, 1
    %p149 = por %p147, %p148
    %p151 = scmp.ne.s32.totalorder %s136, %s150
    %p152 = scmp.eq.s32.totalorder %s21, 0
    %p153 = por %p151, %p152
    %s155 = sadd.s32 %s154, 1
    %p158 = scmp.eq.s32.totalorder %s15, 1
    %p159 = scmp.ne.s32.totalorder %s154, %s156
    %p160 = scmp.eq.s32.totalorder %s15, 0
    %p161 = por %p159, %p160
    %p162 = scmp.ne.s32.totalorder %s154, %s156
    %p163 = scmp.eq.s32.totalorder %s20, 1
    %p164 = por %p162, %p163
    %p165 = scmp.ne.s32.totalorder %s156, %s157
    %p166 = scmp.eq.s32.totalorder %s20, 0
    %p167 = por %p165, %p166
    %p168 = scmp.ne.s32.totalorder %s156, %s157
    %p169 = scmp.eq.s32.totalorder %s21, 1
    %p170 = por %p168, %p169
    %p172 = scmp.ne.s32.totalorder %s157, %s171
    %p173 = scmp.eq.s32.totalorder %s21, 0
    %p174 = por %p172, %p173
    %s176 = sadd.s32 %s175, 1
    %p179 = scmp.eq.s32.totalorder %s15, 1
    %p180 = scmp.ne.s32.totalorder %s175, %s177
    %p181 = scmp.eq.s32.totalorder %s15, 0
    %p182 = por %p180, %p181
    %p183 = scmp.ne.s32.totalorder %s175, %s177
    %p184 = scmp.eq.s32.totalorder %s20, 1
    %p185 = por %p183, %p184
    %p186 = scmp.ne.s32.totalorder %s177, %s178
    %p187 = scmp.eq.s32.totalorder %s20, 0
    %p188 = por %p186, %p187
    %p189 = scmp.ne.s32.totalorder %s177, %s178
    %p190 = scmp.eq.s32.totalorder %s21, 1
    %p191 = por %p189, %p190
    %p193 = scmp.ne.s32.totalorder %s178, %s192
    %p194 = scmp.eq.s32.totalorder %s21, 0
    %p195 = por %p193, %p194
    %s197 = sadd.s32 %s196, 1
    %p200 = scmp.eq.s32.totalorder %s15, 1
    %p201 = scmp.ne.s32.totalorder %s196, %s198
    %p202 = scmp.eq.s32.totalorder %s15, 0
    %p203 = por %p201, %p202
    %p204 = scmp.ne.s32.totalorder %s196, %s198
    %p205 = scmp.eq.s32.totalorder %s20, 1
    %p206 = por %p204, %p205
    %p207 = scmp.ne.s32.totalorder %s198, %s199
    %p208 = scmp.eq.s32.totalorder %s20, 0
    %p209 = por %p207, %p208
    %p210 = scmp.ne.s32.totalorder %s198, %s199
    %p211 = scmp.eq.s32.totalorder %s21, 1
    %p212 = por %p210, %p211
    %p214 = scmp.ne.s32.totalorder %s199, %s213
    %p215 = scmp.eq.s32.totalorder %s21, 0
    %p216 = por %p214, %p215
    %s217 = ssub.s32 %s15, %s22
    %p218 = scmp.eq.s32.totalorder %s217, 0
    %s220 = sadd.s32 %s219, 1
    %s221 = scalar_select %p218, %s219, %s220
    %p224 = pneg %p218
    %p225 = scmp.eq.s32.totalorder %s15, 1
    %p226 = por %p224, %p225
    %p227 = scmp.ne.s32.totalorder %s219, %s222
    %p228 = scmp.eq.s32.totalorder %s15, 0
    %p229 = por %p227, %p228
    %p230 = scmp.ne.s32.totalorder %s219, %s222
    %p231 = scmp.eq.s32.totalorder %s20, 1
    %p232 = por %p230, %p231
    %p233 = scmp.ne.s32.totalorder %s222, %s223
    %p234 = scmp.eq.s32.totalorder %s20, 0
    %p235 = por %p233, %p234
    %p236 = scmp.ne.s32.totalorder %s222, %s223
    %p237 = scmp.eq.s32.totalorder %s21, 1
    %p238 = por %p236, %p237
    %p240 = scmp.ne.s32.totalorder %s223, %s239
    %p241 = scmp.eq.s32.totalorder %s21, 0
    %p242 = por %p240, %p241
    %p243 = scmp.le.s32.totalorder 1, %s15
    %p244 = scmp.lt.s32.totalorder %s15, 3
    %p245 = pnand %p243, %p244
    %p246 = pneg %p245
    // Predicated region
    $region9: #{tpu_custom_call.1} parent=5 // pred_check
      _
    $region10: #{tpu_custom_call.1} parent=5 // pred_check_branch
      %248 = sbr.rel (%p245) target = $region12
    $region11: #{tpu_custom_call.1} parent=5 // pred_region
      %s249 = ssub.s32 %s15, 1
      // Predicated region
      $region13: #{tpu_custom_call.1} parent=11 // pred_check
        %p250 = pneg %p62
      $region14: #{tpu_custom_call.1} parent=11 // pred_check_branch
        %252 = sbr.rel (%p250) target = $region16
      $region15: #{tpu_custom_call.1} parent=11 // pred_region
        _
      $region16: #{tpu_custom_call.1} parent=11 // pred_fallthru
        _
      // Predicated region
      $region17: #{tpu_custom_call.1} parent=11 // pred_check
        %p253 = pneg %p83
      $region18: #{tpu_custom_call.1} parent=11 // pred_check_branch
        %255 = sbr.rel (%p253) target = $region20
      $region19: #{tpu_custom_call.1} parent=11 // pred_region
        _
      $region20: #{tpu_custom_call.1} parent=11 // pred_fallthru
        _
      // Predicated region
      $region21: #{tpu_custom_call.1} parent=11 // pred_check
        %p256 = pneg %p104
      $region22: #{tpu_custom_call.1} parent=11 // pred_check_branch
        %258 = sbr.rel (%p256) target = $region24
      $region23: #{tpu_custom_call.1} parent=11 // pred_region
        _
      $region24: #{tpu_custom_call.1} parent=11 // pred_fallthru
        _
      // Predicated region
      $region25: #{tpu_custom_call.1} parent=11 // pred_check
        %p259 = pneg %p125
      $region26: #{tpu_custom_call.1} parent=11 // pred_check_branch
        %261 = sbr.rel (%p259) target = $region28
      $region27: #{tpu_custom_call.1} parent=11 // pred_region
        _
      $region28: #{tpu_custom_call.1} parent=11 // pred_fallthru
        _
      // Predicated region
      $region29: #{tpu_custom_call.1} parent=11 // pred_check
        %p262 = pneg %p146
      $region30: #{tpu_custom_call.1} parent=11 // pred_check_branch
        %264 = sbr.rel (%p262) target = $region32
      $region31: #{tpu_custom_call.1} parent=11 // pred_region
        _
      $region32: #{tpu_custom_call.1} parent=11 // pred_fallthru
        _
      // Predicated region
      $region33: #{tpu_custom_call.1} parent=11 // pred_check
        %p265 = pneg %p167
      $region34: #{tpu_custom_call.1} parent=11 // pred_check_branch
        %267 = sbr.rel (%p265) target = $region36
      $region35: #{tpu_custom_call.1} parent=11 // pred_region
        _
      $region36: #{tpu_custom_call.1} parent=11 // pred_fallthru
        _
      // Predicated region
      $region37: #{tpu_custom_call.1} parent=11 // pred_check
        %p268 = pneg %p188
      $region38: #{tpu_custom_call.1} parent=11 // pred_check_branch
        %270 = sbr.rel (%p268) target = $region40
      $region39: #{tpu_custom_call.1} parent=11 // pred_region
        _
      $region40: #{tpu_custom_call.1} parent=11 // pred_fallthru
        _
      // Predicated region
      $region41: #{tpu_custom_call.1} parent=11 // pred_check
        %p271 = pneg %p209
      $region42: #{tpu_custom_call.1} parent=11 // pred_check_branch
        %273 = sbr.rel (%p271) target = $region44
      $region43: #{tpu_custom_call.1} parent=11 // pred_region
        _
      $region44: #{tpu_custom_call.1} parent=11 // pred_fallthru
        _
    $region12: #{tpu_custom_call.1} parent=5 // pred_fallthru
      _
    %p274 = scmp.lt.s32.totalorder %s15, 2
    // Predicated region
    $region45: #{tpu_custom_call.1} parent=5 // pred_check
      %p275 = pneg %p274
    $region46: #{tpu_custom_call.1} parent=5 // pred_check_branch
      %277 = sbr.rel (%p275) target = $region48
    $region47: #{tpu_custom_call.1} parent=5 // pred_region
      // Predicated region
      $region49: #{tpu_custom_call.1} parent=47 // pred_check
        %p278 = pneg %p35
      $region50: #{tpu_custom_call.1} parent=47 // pred_check_branch
        %280 = sbr.rel (%p278) target = $region52
      $region51: #{tpu_custom_call.1} parent=47 // pred_region
        %s281 = smul.u32 32, %s15
        %p282 = scmp.lt.s32.totalorder %s281, 63
        %s283 = scalar_select %p282, %s281, 63
        %s284 = smul.addr %s283, 8
        %s285 = scalar_lea.vmem %s0, %s284
        %s286 = smul.u32 32, %s15
      $region52: #{tpu_custom_call.1} parent=47 // pred_fallthru
        _
    $region48: #{tpu_custom_call.1} parent=5 // pred_fallthru
      _
    %p287 = scmp.le.s32.totalorder 1, %s15
    %p288 = scmp.lt.s32.totalorder %s15, 3
    %p289 = pnand %p287, %p288
    %p290 = pneg %p289
    // Predicated region
    $region53: #{tpu_custom_call.1} parent=5 // pred_check
      _
    $region54: #{tpu_custom_call.1} parent=5 // pred_check_branch
      %292 = sbr.rel (%p289) target = $region56
    $region55: #{tpu_custom_call.1} parent=5 // pred_region
      %s293 = ssub.s32 %s15, 1
      %s294 = smul.u32 32, %s20
      %p295 = scmp.lt.s32.totalorder %s294, 63
      %s296 = scalar_select %p295, %s294, 63
      %s297 = smul.addr %s296, 8
      %s298 = scalar_lea.vmem %s0, %s297
      %p299 = pneg %p41
      %p300 = pneg %p38
      %p301 = pneg %p62
      %p302 = pneg %p59
      %p303 = pneg %p83
      %p304 = pneg %p80
      %p305 = pneg %p104
      %p306 = pneg %p101
      %p307 = pneg %p125
      %p308 = pneg %p122
      %p309 = pneg %p146
      %p310 = pneg %p143
      %p311 = pneg %p167
      %p312 = pneg %p164
      %p313 = pneg %p188
      %p314 = pneg %p185
      %p315 = pneg %p209
      %p316 = pneg %p206
      %p317 = pneg %p235
      %p318 = pneg %p232
      %s319 = smul.u32 32, %s20
      %p320 = scmp.lt.s32.totalorder %s319, 63
      %s321 = scalar_select %p320, %s319, 63
      %s322 = smul.addr %s321, 8
      %s323 = scalar_lea.vmem %s9, %s322
      %s324 = smul.u32 32, %s20
      %p325 = scmp.lt.s32.totalorder %s324, 63
      %s326 = scalar_select %p325, %s324, 63
      %s327 = smul.addr %s326, 8
      %s328 = scalar_lea.vmem %s0, %s327
      %s329 = smul.u32 32, %s20
      %s330 = smul.u32 32, %s20
      %p331 = scmp.lt.s32.totalorder %s330, 63
      %s332 = scalar_select %p331, %s330, 63
      %s333 = smul.addr %s332, 8
      %s334 = scalar_lea.vmem %s9, %s333
      %s335 = smul.u32 32, %s20
      %v337 = vld [vmem:[%s328] sm:$0xff]
      %v338 = vld [vmem:[%s328 + $0x8] sm:$0xff]
      %v339 = vld [vmem:[%s328 + $0x10] sm:$0xff]
      %v340 = vld [vmem:[%s328 + $0x18] sm:$0xff]
      %v341 = vld [vmem:[%s328 + $0x20] sm:$0xff]
      %v342 = vld [vmem:[%s328 + $0x28] sm:$0xff]
      %v343 = vld [vmem:[%s328 + $0x30] sm:$0xff]
      %v344 = vld [vmem:[%s328 + $0x38] sm:$0xff]
      %v345 = vld [vmem:[%s328 + $0x40] sm:$0xff]
      %v346 = vld [vmem:[%s328 + $0x48] sm:$0xff]
      %v347 = vld [vmem:[%s328 + $0x50] sm:$0xff]
      %v348 = vld [vmem:[%s328 + $0x58] sm:$0xff]
      %v349 = vld [vmem:[%s328 + $0x60] sm:$0xff]
      %v350 = vld [vmem:[%s328 + $0x68] sm:$0xff]
      %v351 = vld [vmem:[%s328 + $0x70] sm:$0xff]
      %v352 = vld [vmem:[%s328 + $0x78] sm:$0xff]
      %v353 = vld [vmem:[%s328 + $0x80] sm:$0xff]
      %v354 = vld [vmem:[%s328 + $0x88] sm:$0xff]
      %v355 = vld [vmem:[%s328 + $0x90] sm:$0xff]
      %v356 = vld [vmem:[%s328 + $0x98] sm:$0xff]
      %v357 = vld [vmem:[%s328 + $0xa0] sm:$0xff]
      %v358 = vld [vmem:[%s328 + $0xa8] sm:$0xff]
      %v359 = vld [vmem:[%s328 + $0xb0] sm:$0xff]
      %v360 = vld [vmem:[%s328 + $0xb8] sm:$0xff]
      %v361 = vld [vmem:[%s328 + $0xc0] sm:$0xff]
      %v362 = vld [vmem:[%s328 + $0xc8] sm:$0xff]
      %v363 = vld [vmem:[%s328 + $0xd0] sm:$0xff]
      %v364 = vld [vmem:[%s328 + $0xd8] sm:$0xff]
      %v365 = vld [vmem:[%s328 + $0xe0] sm:$0xff]
      %v366 = vld [vmem:[%s328 + $0xe8] sm:$0xff]
      %v367 = vld [vmem:[%s328 + $0xf0] sm:$0xff]
      %v368 = vld [vmem:[%s328 + $0xf8] sm:$0xff]
      %v369 = vpack.c.bf16 %v338, %v337
      %v370 = vpack.c.bf16 %v340, %v339
      %v371 = vpack.c.bf16 %v342, %v341
      %v372 = vpack.c.bf16 %v344, %v343
      %v373 = vpack.c.bf16 %v346, %v345
      %v374 = vpack.c.bf16 %v348, %v347
      %v375 = vpack.c.bf16 %v350, %v349
      %v376 = vpack.c.bf16 %v352, %v351
      %v377 = vpack.c.bf16 %v354, %v353
      %v378 = vpack.c.bf16 %v356, %v355
      %v379 = vpack.c.bf16 %v358, %v357
      %v380 = vpack.c.bf16 %v360, %v359
      %v381 = vpack.c.bf16 %v362, %v361
      %v382 = vpack.c.bf16 %v364, %v363
      %v383 = vpack.c.bf16 %v366, %v365
      %v384 = vpack.c.bf16 %v368, %v367
      %v385 = vld [vmem:[%s1] sm:$0xff]
      %v386 = vld [vmem:[%s1 + $0x8] sm:$0x11]
      %v387 = vld [vmem:[%s2] sm:$0x3]
      %v389 = vlaneseq
      %v390 = vshrl.u32 %v389, 7
      %v391 = vsub.s32 0, %v390
      %v392 = vrot.slane %v387, %v391
      %v393 = vlaneseq
      %v394 = vshrl.u32 %v393, 7
      %v395 = vsub.s32 1, %v394
      %v396 = vrot.slane %v387, %v395
      %v401 = vunpack.c.l.b16 %v385
      %v402 = vunpack.c.h.b16 %v385
      %v403 = vunpack.c.l.b16 %v386
      %v404 = vunpack.c.h.b16 %v386
      %v405 = vpack.c.b16 %v403, %v401
      %v406 = vpack.c.b16 %v404, %v402
      %vm407 = vcmask 80896
      %v409 = vsel %vm407, %v369, 0
      %v412 = vsel %vm407, %v370, 0
      %v415 = vsel %vm407, %v371, 0
      %v418 = vsel %vm407, %v372, 0
      %v421 = vsel %vm407, %v373, 0
      %v424 = vsel %vm407, %v374, 0
      %v427 = vsel %vm407, %v375, 0
      %v430 = vsel %vm407, %v376, 0
      %v433 = vsel %vm407, %v377, 0
      %v436 = vsel %vm407, %v378, 0
      %v439 = vsel %vm407, %v379, 0
      %v442 = vsel %vm407, %v380, 0
      %v445 = vsel %vm407, %v381, 0
      %v448 = vsel %vm407, %v382, 0
      %v451 = vsel %vm407, %v383, 0
      %v454 = vsel %vm407, %v384, 0
      %vm456 = vcmask 1044480
      %v458 = vsel %vm456, %v405, 0
      %v461 = vsel %vm456, %v406, 0
      %463 = vmatprep.subr.bf16.mxu0 %v461
      %464 = vmatpush1.bf16.msra.mxu0 %v458
      %465 = vmatprep.subr.bf16.mxu0 0
      %466 = vmatpush1.bf16.msra.mxu0 0
      %467 = vmatprep.subr.bf16.mxu0 0
      %468 = vmatpush1.bf16.msra.mxu0 0
      %469 = vmatprep.subr.bf16.mxu0 0
      %470 = vmatpush1.bf16.msra.mxu0 0
      %471 = vmatprep.subr.bf16.mxu0 0
      %472 = vmatpush1.bf16.msra.mxu0 0
      %473 = vmatprep.subr.bf16.mxu0 0
      %474 = vmatpush1.bf16.msra.mxu0 0
      %475 = vmatprep.subr.bf16.mxu0 0
      %476 = vmatpush1.bf16.msra.mxu0 0
      %477 = vmatprep.subr.bf16.mxu0 0
      %478 = vmatpush1.bf16.msra.mxu0 0
      %479 = vmatprep.subr.bf16.mxu0 0
      %480 = vmatpush1.bf16.msra.mxu0 0
      %481 = vmatprep.subr.bf16.mxu0 0
      %482 = vmatpush1.bf16.msra.mxu0 0
      %483 = vmatprep.subr.bf16.mxu0 0
      %484 = vmatpush1.bf16.msra.mxu0 0
      %485 = vmatprep.subr.bf16.mxu0 0
      %486 = vmatpush1.bf16.msra.mxu0 0
      %487 = vmatprep.subr.bf16.mxu0 0
      %488 = vmatpush1.bf16.msra.mxu0 0
      %489 = vmatprep.subr.bf16.mxu0 0
      %490 = vmatpush1.bf16.msra.mxu0 0
      %491 = vmatprep.subr.bf16.mxu0 0
      %492 = vmatpush1.bf16.msra.mxu0 0
      %493 = vmatprep.subr.bf16.mxu0 0
      %494 = vmatpush1.bf16.msra.mxu0 0
      %495 = vmatprep.mubr.bf16.mxu0 0
      %496 = vmatmul.mubr.bf16.gmra.mrb[0].mxu0 %v409
      %v497 = vpop.f32.mrb[0].mxu0
      %v498 = vadd.f32 %v392, %v497
      %v499 = vpop.f32.mrb[0].mxu0
      %v500 = vadd.f32 %v396, %v499
      %v501 = vpop.f32.mrb[0].mxu0
      %v502 = vadd.f32 %v392, %v501
      %v503 = vpop.f32.mrb[0].mxu0
      %v504 = vadd.f32 %v396, %v503
      %505 = vmatprep.mubr.bf16.mxu0 0
      %506 = vmatmul.mubr.bf16.gmra.mrb[0].mxu0 %v412
      %v507 = vpop.f32.mrb[0].mxu0
      %v508 = vadd.f32 %v392, %v507
      %v509 = vpop.f32.mrb[0].mxu0
      %v510 = vadd.f32 %v396, %v509
      %v511 = vpop.f32.mrb[0].mxu0
      %v512 = vadd.f32 %v392, %v511
      %v513 = vpop.f32.mrb[0].mxu0
      %v514 = vadd.f32 %v396, %v513
      %515 = vmatprep.mubr.bf16.mxu0 0
      %516 = vmatmul.mubr.bf16.gmra.mrb[0].mxu0 %v415
      %v517 = vpop.f32.mrb[0].mxu0
      %v518 = vadd.f32 %v392, %v517
      %v519 = vpop.f32.mrb[0].mxu0
      %v520 = vadd.f32 %v396, %v519
      %v521 = vpop.f32.mrb[0].mxu0
      %v522 = vadd.f32 %v392, %v521
      %v523 = vpop.f32.mrb[0].mxu0
      %v524 = vadd.f32 %v396, %v523
      %525 = vmatprep.mubr.bf16.mxu0 0
      %526 = vmatmul.mubr.bf16.gmra.mrb[0].mxu0 %v418
      %v527 = vpop.f32.mrb[0].mxu0
      %v528 = vadd.f32 %v392, %v527
      %v529 = vpop.f32.mrb[0].mxu0
      %v530 = vadd.f32 %v396, %v529
      %v531 = vpop.f32.mrb[0].mxu0
      %v532 = vadd.f32 %v392, %v531
      %v533 = vpop.f32.mrb[0].mxu0
      %v534 = vadd.f32 %v396, %v533
      %535 = vmatprep.mubr.bf16.mxu0 0
      %536 = vmatmul.mubr.bf16.gmra.mrb[0].mxu0 %v421
      %v537 = vpop.f32.mrb[0].mxu0
      %v538 = vadd.f32 %v392, %v537
      %v539 = vpop.f32.mrb[0].mxu0
      %v540 = vadd.f32 %v396, %v539
      %v541 = vpop.f32.mrb[0].mxu0
      %v542 = vadd.f32 %v392, %v541
      %v543 = vpop.f32.mrb[0].mxu0
      %v544 = vadd.f32 %v396, %v543
      %545 = vmatprep.mubr.bf16.mxu0 0
      %546 = vmatmul.mubr.bf16.gmra.mrb[0].mxu0 %v424
      %v547 = vpop.f32.mrb[0].mxu0
      %v548 = vadd.f32 %v392, %v547
      %v549 = vpop.f32.mrb[0].mxu0
      %v550 = vadd.f32 %v396, %v549
      %v551 = vpop.f32.mrb[0].mxu0
      %v552 = vadd.f32 %v392, %v551
      %v553 = vpop.f32.mrb[0].mxu0
      %v554 = vadd.f32 %v396, %v553
      %555 = vmatprep.mubr.bf16.mxu0 0
      %556 = vmatmul.mubr.bf16.gmra.mrb[0].mxu0 %v427
      %v557 = vpop.f32.mrb[0].mxu0
      %v558 = vadd.f32 %v392, %v557
      %v559 = vpop.f32.mrb[0].mxu0
      %v560 = vadd.f32 %v396, %v559
      %v561 = vpop.f32.mrb[0].mxu0
      %v562 = vadd.f32 %v392, %v561
      %v563 = vpop.f32.mrb[0].mxu0
      %v564 = vadd.f32 %v396, %v563
      %565 = vmatprep.mubr.bf16.mxu0 0
      %566 = vmatmul.mubr.bf16.gmra.mrb[0].mxu0 %v430
      %v567 = vpop.f32.mrb[0].mxu0
      %v568 = vadd.f32 %v392, %v567
      %v569 = vpop.f32.mrb[0].mxu0
      %v570 = vadd.f32 %v396, %v569
      %v571 = vpop.f32.mrb[0].mxu0
      %v572 = vadd.f32 %v392, %v571
      %v573 = vpop.f32.mrb[0].mxu0
      %v574 = vadd.f32 %v396, %v573
      %575 = vmatprep.mubr.bf16.mxu0 0
      %576 = vmatmul.mubr.bf16.gmra.mrb[0].mxu0 %v433
      %v577 = vpop.f32.mrb[0].mxu0
      %v578 = vadd.f32 %v392, %v577
      %v579 = vpop.f32.mrb[0].mxu0
      %v580 = vadd.f32 %v396, %v579
      %v581 = vpop.f32.mrb[0].mxu0
      %v582 = vadd.f32 %v392, %v581
      %v583 = vpop.f32.mrb[0].mxu0
      %v584 = vadd.f32 %v396, %v583
      %585 = vmatprep.mubr.bf16.mxu0 0
      %586 = vmatmul.mubr.bf16.gmra.mrb[0].mxu0 %v436
      %v587 = vpop.f32.mrb[0].mxu0
      %v588 = vadd.f32 %v392, %v587
      %v589 = vpop.f32.mrb[0].mxu0
      %v590 = vadd.f32 %v396, %v589
      %v591 = vpop.f32.mrb[0].mxu0
      %v592 = vadd.f32 %v392, %v591
      %v593 = vpop.f32.mrb[0].mxu0
      %v594 = vadd.f32 %v396, %v593
      %595 = vmatprep.mubr.bf16.mxu0 0
      %596 = vmatmul.mubr.bf16.gmra.mrb[0].mxu0 %v439
      %v597 = vpop.f32.mrb[0].mxu0
      %v598 = vadd.f32 %v392, %v597
      %v599 = vpop.f32.mrb[0].mxu0
      %v600 = vadd.f32 %v396, %v599
      %v601 = vpop.f32.mrb[0].mxu0
      %v602 = vadd.f32 %v392, %v601
      %v603 = vpop.f32.mrb[0].mxu0
      %v604 = vadd.f32 %v396, %v603
      %605 = vmatprep.mubr.bf16.mxu0 0
      %606 = vmatmul.mubr.bf16.gmra.mrb[0].mxu0 %v442
      %v607 = vpop.f32.mrb[0].mxu0
      %v608 = vadd.f32 %v392, %v607
      %v609 = vpop.f32.mrb[0].mxu0
      %v610 = vadd.f32 %v396, %v609
      %v611 = vpop.f32.mrb[0].mxu0
      %v612 = vadd.f32 %v392, %v611
      %v613 = vpop.f32.mrb[0].mxu0
      %v614 = vadd.f32 %v396, %v613
      %615 = vmatprep.mubr.bf16.mxu0 0
      %616 = vmatmul.mubr.bf16.gmra.mrb[0].mxu0 %v445
      %v617 = vpop.f32.mrb[0].mxu0
      %v618 = vadd.f32 %v392, %v617
      %v619 = vpop.f32.mrb[0].mxu0
      %v620 = vadd.f32 %v396, %v619
      %v621 = vpop.f32.mrb[0].mxu0
      %v622 = vadd.f32 %v392, %v621
      %v623 = vpop.f32.mrb[0].mxu0
      %v624 = vadd.f32 %v396, %v623
      %625 = vmatprep.mubr.bf16.mxu0 0
      %626 = vmatmul.mubr.bf16.gmra.mrb[0].mxu0 %v448
      %v627 = vpop.f32.mrb[0].mxu0
      %v628 = vadd.f32 %v392, %v627
      %v629 = vpop.f32.mrb[0].mxu0
      %v630 = vadd.f32 %v396, %v629
      %v631 = vpop.f32.mrb[0].mxu0
      %v632 = vadd.f32 %v392, %v631
      %v633 = vpop.f32.mrb[0].mxu0
      %v634 = vadd.f32 %v396, %v633
      %635 = vmatprep.mubr.bf16.mxu0 0
      %636 = vmatmul.mubr.bf16.gmra.mrb[0].mxu0 %v451
      %v637 = vpop.f32.mrb[0].mxu0
      %v638 = vadd.f32 %v392, %v637
      %v639 = vpop.f32.mrb[0].mxu0
      %v640 = vadd.f32 %v396, %v639
      %v641 = vpop.f32.mrb[0].mxu0
      %v642 = vadd.f32 %v392, %v641
      %v643 = vpop.f32.mrb[0].mxu0
      %v644 = vadd.f32 %v396, %v643
      %645 = vmatprep.mubr.bf16.mxu0 0
      %646 = vmatmul.mubr.bf16.gmra.mrb[0].mxu0 %v454
      %v647 = vpop.f32.mrb[0].mxu0
      %v648 = vadd.f32 %v392, %v647
      %v649 = vpop.f32.mrb[0].mxu0
      %v650 = vadd.f32 %v396, %v649
      %v651 = vpop.f32.mrb[0].mxu0
      %v652 = vadd.f32 %v392, %v651
      %v653 = vpop.f32.mrb[0].mxu0
      %v654 = vadd.f32 %v396, %v653
      %655 = vdwg.mxu0
      %v656 = vmax.f32 %v498, 0.0
      %v657 = vmax.f32 %v500, 0.0
      %v658 = vmax.f32 %v502, 0.0
      %v659 = vmax.f32 %v504, 0.0
      %v660 = vmax.f32 %v508, 0.0
      %v661 = vmax.f32 %v510, 0.0
      %v662 = vmax.f32 %v512, 0.0
      %v663 = vmax.f32 %v514, 0.0
      %v664 = vmax.f32 %v518, 0.0
      %v665 = vmax.f32 %v520, 0.0
      %v666 = vmax.f32 %v522, 0.0
      %v667 = vmax.f32 %v524, 0.0
      %v668 = vmax.f32 %v528, 0.0
      %v669 = vmax.f32 %v530, 0.0
      %v670 = vmax.f32 %v532, 0.0
      %v671 = vmax.f32 %v534, 0.0
      %v672 = vmax.f32 %v538, 0.0
      %v673 = vmax.f32 %v540, 0.0
      %v674 = vmax.f32 %v542, 0.0
      %v675 = vmax.f32 %v544, 0.0
      %v676 = vmax.f32 %v548, 0.0
      %v677 = vmax.f32 %v550, 0.0
      %v678 = vmax.f32 %v552, 0.0
      %v679 = vmax.f32 %v554, 0.0
      %v680 = vmax.f32 %v558, 0.0
      %v681 = vmax.f32 %v560, 0.0
      %v682 = vmax.f32 %v562, 0.0
      %v683 = vmax.f32 %v564, 0.0
      %v684 = vmax.f32 %v568, 0.0
      %v685 = vmax.f32 %v570, 0.0
      %v686 = vmax.f32 %v572, 0.0
      %v687 = vmax.f32 %v574, 0.0
      %v688 = vmax.f32 %v578, 0.0
      %v689 = vmax.f32 %v580, 0.0
      %v690 = vmax.f32 %v582, 0.0
      %v691 = vmax.f32 %v584, 0.0
      %v692 = vmax.f32 %v588, 0.0
      %v693 = vmax.f32 %v590, 0.0
      %v694 = vmax.f32 %v592, 0.0
      %v695 = vmax.f32 %v594, 0.0
      %v696 = vmax.f32 %v598, 0.0
      %v697 = vmax.f32 %v600, 0.0
      %v698 = vmax.f32 %v602, 0.0
      %v699 = vmax.f32 %v604, 0.0
      %v700 = vmax.f32 %v608, 0.0
      %v701 = vmax.f32 %v610, 0.0
      %v702 = vmax.f32 %v612, 0.0
      %v703 = vmax.f32 %v614, 0.0
      %v704 = vmax.f32 %v618, 0.0
      %v705 = vmax.f32 %v620, 0.0
      %v706 = vmax.f32 %v622, 0.0
      %v707 = vmax.f32 %v624, 0.0
      %v708 = vmax.f32 %v628, 0.0
      %v709 = vmax.f32 %v630, 0.0
      %v710 = vmax.f32 %v632, 0.0
      %v711 = vmax.f32 %v634, 0.0
      %v712 = vmax.f32 %v638, 0.0
      %v713 = vmax.f32 %v640, 0.0
      %v714 = vmax.f32 %v642, 0.0
      %v715 = vmax.f32 %v644, 0.0
      %v716 = vmax.f32 %v648, 0.0
      %v717 = vmax.f32 %v650, 0.0
      %v718 = vmax.f32 %v652, 0.0
      %v719 = vmax.f32 %v654, 0.0
      %v720 = vpack.c.bf16 %v658, %v656
      %v721 = vpack.c.bf16 %v659, %v657
      %v722 = vpack.c.bf16 %v662, %v660
      %v723 = vpack.c.bf16 %v663, %v661
      %v724 = vpack.c.bf16 %v666, %v664
      %v725 = vpack.c.bf16 %v667, %v665
      %v726 = vpack.c.bf16 %v670, %v668
      %v727 = vpack.c.bf16 %v671, %v669
      %v728 = vpack.c.bf16 %v674, %v672
      %v729 = vpack.c.bf16 %v675, %v673
      %v730 = vpack.c.bf16 %v678, %v676
      %v731 = vpack.c.bf16 %v679, %v677
      %v732 = vpack.c.bf16 %v682, %v680
      %v733 = vpack.c.bf16 %v683, %v681
      %v734 = vpack.c.bf16 %v686, %v684
      %v735 = vpack.c.bf16 %v687, %v685
      %v736 = vpack.c.bf16 %v690, %v688
      %v737 = vpack.c.bf16 %v691, %v689
      %v738 = vpack.c.bf16 %v694, %v692
      %v739 = vpack.c.bf16 %v695, %v693
      %v740 = vpack.c.bf16 %v698, %v696
      %v741 = vpack.c.bf16 %v699, %v697
      %v742 = vpack.c.bf16 %v702, %v700
      %v743 = vpack.c.bf16 %v703, %v701
      %v744 = vpack.c.bf16 %v706, %v704
      %v745 = vpack.c.bf16 %v707, %v705
      %v746 = vpack.c.bf16 %v710, %v708
      %v747 = vpack.c.bf16 %v711, %v709
      %v748 = vpack.c.bf16 %v714, %v712
      %v749 = vpack.c.bf16 %v715, %v713
      %v750 = vpack.c.bf16 %v718, %v716
      %v751 = vpack.c.bf16 %v719, %v717
      %v752 = vld [vmem:[%s3] sm:$0xff]
      %v753 = vld [vmem:[%s3 + $0x8] sm:$0xff]
      %v754 = vld [vmem:[%s3 + $0x10] sm:$0xff]
      %v755 = vld [vmem:[%s3 + $0x18] sm:$0xff]
      %v756 = vld [vmem:[%s3 + $0x20] sm:$0xff]
      %v757 = vld [vmem:[%s3 + $0x28] sm:$0xff]
      %v758 = vld [vmem:[%s3 + $0x30] sm:$0xff]
      %v759 = vld [vmem:[%s3 + $0x38] sm:$0xff]
      %v760 = vld [vmem:[%s3 + $0x40] sm:$0xff]
      %v761 = vld [vmem:[%s3 + $0x48] sm:$0xff]
      %v762 = vld [vmem:[%s3 + $0x50] sm:$0xff]
      %v763 = vld [vmem:[%s3 + $0x58] sm:$0xff]
      %v764 = vld [vmem:[%s3 + $0x60] sm:$0xff]
      %v765 = vld [vmem:[%s3 + $0x68] sm:$0xff]
      %v766 = vld [vmem:[%s3 + $0x70] sm:$0xff]
      %v767 = vld [vmem:[%s3 + $0x78] sm:$0xff]
      %v768 = vld [vmem:[%s3 + $0x80] sm:$0xff]
      %v769 = vld [vmem:[%s3 + $0x88] sm:$0xff]
      %v770 = vld [vmem:[%s3 + $0x90] sm:$0xff]
      %v771 = vld [vmem:[%s3 + $0x98] sm:$0xff]
      %v772 = vld [vmem:[%s3 + $0xa0] sm:$0xff]
      %v773 = vld [vmem:[%s3 + $0xa8] sm:$0xff]
      %v774 = vld [vmem:[%s3 + $0xb0] sm:$0xff]
      %v775 = vld [vmem:[%s3 + $0xb8] sm:$0xff]
      %v776 = vld [vmem:[%s3 + $0xc0] sm:$0xff]
      %v777 = vld [vmem:[%s3 + $0xc8] sm:$0xff]
      %v778 = vld [vmem:[%s3 + $0xd0] sm:$0xff]
      %v779 = vld [vmem:[%s3 + $0xd8] sm:$0xff]
      %v780 = vld [vmem:[%s3 + $0xe0] sm:$0xff]
      %v781 = vld [vmem:[%s3 + $0xe8] sm:$0xff]
      %v782 = vld [vmem:[%s3 + $0xf0] sm:$0xff]
      %v783 = vld [vmem:[%s3 + $0xf8] sm:$0xff]
      %v784 = vld [vmem:[%s4] sm:$0x3]
      %v786 = vlaneseq
      %v787 = vshrl.u32 %v786, 7
      %v788 = vsub.s32 0, %v787
      %v789 = vrot.slane %v784, %v788
      %v790 = vlaneseq
      %v791 = vshrl.u32 %v790, 7
      %v792 = vsub.s32 1, %v791
      %v793 = vrot.slane %v784, %v792
      %v828 = vunpack.c.l.b16 %v752
      %v829 = vunpack.c.h.b16 %v752
      %v830 = vunpack.c.l.b16 %v753
      %v831 = vunpack.c.h.b16 %v753
      %v832 = vunpack.c.l.b16 %v754
      %v833 = vunpack.c.h.b16 %v754
      %v834 = vunpack.c.l.b16 %v755
      %v835 = vunpack.c.h.b16 %v755
      %v836 = vunpack.c.l.b16 %v756
      %v837 = vunpack.c.h.b16 %v756
      %v838 = vunpack.c.l.b16 %v757
      %v839 = vunpack.c.h.b16 %v757
      %v840 = vunpack.c.l.b16 %v758
      %v841 = vunpack.c.h.b16 %v758
      %v842 = vunpack.c.l.b16 %v759
      %v843 = vunpack.c.h.b16 %v759
      %v844 = vunpack.c.l.b16 %v760
      %v845 = vunpack.c.h.b16 %v760
      %v846 = vunpack.c.l.b16 %v761
      %v847 = vunpack.c.h.b16 %v761
      %v848 = vunpack.c.l.b16 %v762
      %v849 = vunpack.c.h.b16 %v762
      %v850 = vunpack.c.l.b16 %v763
      %v851 = vunpack.c.h.b16 %v763
      %v852 = vunpack.c.l.b16 %v764
      %v853 = vunpack.c.h.b16 %v764
      %v854 = vunpack.c.l.b16 %v765
      %v855 = vunpack.c.h.b16 %v765
      %v856 = vunpack.c.l.b16 %v766
      %v857 = vunpack.c.h.b16 %v766
      %v858 = vunpack.c.l.b16 %v767
      %v859 = vunpack.c.h.b16 %v767
      %v860 = vunpack.c.l.b16 %v768
      %v861 = vunpack.c.h.b16 %v768
      %v862 = vunpack.c.l.b16 %v769
      %v863 = vunpack.c.h.b16 %v769
      %v864 = vunpack.c.l.b16 %v770
      %v865 = vunpack.c.h.b16 %v770
      %v866 = vunpack.c.l.b16 %v771
      %v867 = vunpack.c.h.b16 %v771
      %v868 = vunpack.c.l.b16 %v772
      %v869 = vunpack.c.h.b16 %v772
      %v870 = vunpack.c.l.b16 %v773
      %v871 = vunpack.c.h.b16 %v773
      %v872 = vunpack.c.l.b16 %v774
      %v873 = vunpack.c.h.b16 %v774
      %v874 = vunpack.c.l.b16 %v775
      %v875 = vunpack.c.h.b16 %v775
      %v876 = vunpack.c.l.b16 %v776
      %v877 = vunpack.c.h.b16 %v776
      %v878 = vunpack.c.l.b16 %v777
      %v879 = vunpack.c.h.b16 %v777
      %v880 = vunpack.c.l.b16 %v778
      %v881 = vunpack.c.h.b16 %v778
      %v882 = vunpack.c.l.b16 %v779
      %v883 = vunpack.c.h.b16 %v779
      %v884 = vunpack.c.l.b16 %v780
      %v885 = vunpack.c.h.b16 %v780
      %v886 = vunpack.c.l.b16 %v781
      %v887 = vunpack.c.h.b16 %v781
      %v888 = vunpack.c.l.b16 %v782
      %v889 = vunpack.c.h.b16 %v782
      %v890 = vunpack.c.l.b16 %v783
      %v891 = vunpack.c.h.b16 %v783
      %v892 = vpack.c.b16 %v830, %v828
      %v893 = vpack.c.b16 %v831, %v829
      %v894 = vpack.c.b16 %v834, %v832
      %v895 = vpack.c.b16 %v835, %v833
      %v896 = vpack.c.b16 %v838, %v836
      %v897 = vpack.c.b16 %v839, %v837
      %v898 = vpack.c.b16 %v842, %v840
      %v899 = vpack.c.b16 %v843, %v841
      %v900 = vpack.c.b16 %v846, %v844
      %v901 = vpack.c.b16 %v847, %v845
      %v902 = vpack.c.b16 %v850, %v848
      %v903 = vpack.c.b16 %v851, %v849
      %v904 = vpack.c.b16 %v854, %v852
      %v905 = vpack.c.b16 %v855, %v853
      %v906 = vpack.c.b16 %v858, %v856
      %v907 = vpack.c.b16 %v859, %v857
      %v908 = vpack.c.b16 %v862, %v860
      %v909 = vpack.c.b16 %v863, %v861
      %v910 = vpack.c.b16 %v866, %v864
      %v911 = vpack.c.b16 %v867, %v865
      %v912 = vpack.c.b16 %v870, %v868
      %v913 = vpack.c.b16 %v871, %v869
      %v914 = vpack.c.b16 %v874, %v872
      %v915 = vpack.c.b16 %v875, %v873
      %v916 = vpack.c.b16 %v878, %v876
      %v917 = vpack.c.b16 %v879, %v877
      %v918 = vpack.c.b16 %v882, %v880
      %v919 = vpack.c.b16 %v883, %v881
      %v920 = vpack.c.b16 %v886, %v884
      %v921 = vpack.c.b16 %v887, %v885
      %v922 = vpack.c.b16 %v890, %v888
      %v923 = vpack.c.b16 %v891, %v889
      %956 = vmatprep.subr.bf16.mxu0 %v893
      %957 = vmatpush1.bf16.msra.mxu0 %v892
      %958 = vmatprep.subr.bf16.mxu0 %v895
      %959 = vmatpush1.bf16.msra.mxu0 %v894
      %960 = vmatprep.subr.bf16.mxu0 %v897
      %961 = vmatpush1.bf16.msra.mxu0 %v896
      %962 = vmatprep.subr.bf16.mxu0 %v899
      %963 = vmatpush1.bf16.msra.mxu0 %v898
      %964 = vmatprep.subr.bf16.mxu0 %v901
      %965 = vmatpush1.bf16.msra.mxu0 %v900
      %966 = vmatprep.subr.bf16.mxu0 %v903
      %967 = vmatpush1.bf16.msra.mxu0 %v902
      %968 = vmatprep.subr.bf16.mxu0 %v905
      %969 = vmatpush1.bf16.msra.mxu0 %v904
      %970 = vmatprep.subr.bf16.mxu0 %v907
      %971 = vmatpush1.bf16.msra.mxu0 %v906
      %972 = vmatprep.subr.bf16.mxu0 %v909
      %973 = vmatpush1.bf16.msra.mxu0 %v908
      %974 = vmatprep.subr.bf16.mxu0 %v911
      %975 = vmatpush1.bf16.msra.mxu0 %v910
      %976 = vmatprep.subr.bf16.mxu0 %v913
      %977 = vmatpush1.bf16.msra.mxu0 %v912
      %978 = vmatprep.subr.bf16.mxu0 %v915
      %979 = vmatpush1.bf16.msra.mxu0 %v914
      %980 = vmatprep.subr.bf16.mxu0 %v917
      %981 = vmatpush1.bf16.msra.mxu0 %v916
      %982 = vmatprep.subr.bf16.mxu0 %v919
      %983 = vmatpush1.bf16.msra.mxu0 %v918
      %984 = vmatprep.subr.bf16.mxu0 %v921
      %985 = vmatpush1.bf16.msra.mxu0 %v920
      %986 = vmatprep.subr.bf16.mxu0 %v923
      %987 = vmatpush1.bf16.msra.mxu0 %v922
      %988 = vmatprep.mubr.bf16.mxu0 %v721
      %989 = vmatmul.mubr.bf16.gmra.mrb[0].mxu0 %v720
      %v990 = vpop.f32.mrb[0].mxu0
      %v991 = vadd.f32 %v789, %v990
      %v992 = vpop.f32.mrb[0].mxu0
      %v993 = vadd.f32 %v793, %v992
      %v994 = vpop.f32.mrb[0].mxu0
      %v995 = vadd.f32 %v789, %v994
      %v996 = vpop.f32.mrb[0].mxu0
      %v997 = vadd.f32 %v793, %v996
      %998 = vmatprep.mubr.bf16.mxu0 %v723
      %999 = vmatmul.mubr.bf16.gmra.mrb[0].mxu0 %v722
      %v1000 = vpop.f32.mrb[0].mxu0
      %v1001 = vadd.f32 %v789, %v1000
      %v1002 = vpop.f32.mrb[0].mxu0
      %v1003 = vadd.f32 %v793, %v1002
      %v1004 = vpop.f32.mrb[0].mxu0
      %v1005 = vadd.f32 %v789, %v1004
      %v1006 = vpop.f32.mrb[0].mxu0
      %v1007 = vadd.f32 %v793, %v1006
      %1008 = vmatprep.mubr.bf16.mxu0 %v725
      %1009 = vmatmul.mubr.bf16.gmra.mrb[0].mxu0 %v724
      %v1010 = vpop.f32.mrb[0].mxu0
      %v1011 = vadd.f32 %v789, %v1010
      %v1012 = vpop.f32.mrb[0].mxu0
      %v1013 = vadd.f32 %v793, %v1012
      %v1014 = vpop.f32.mrb[0].mxu0
      %v1015 = vadd.f32 %v789, %v1014
      %v1016 = vpop.f32.mrb[0].mxu0
      %v1017 = vadd.f32 %v793, %v1016
      %1018 = vmatprep.mubr.bf16.mxu0 %v727
      %1019 = vmatmul.mubr.bf16.gmra.mrb[0].mxu0 %v726
      %v1020 = vpop.f32.mrb[0].mxu0
      %v1021 = vadd.f32 %v789, %v1020
      %v1022 = vpop.f32.mrb[0].mxu0
      %v1023 = vadd.f32 %v793, %v1022
      %v1024 = vpop.f32.mrb[0].mxu0
      %v1025 = vadd.f32 %v789, %v1024
      %v1026 = vpop.f32.mrb[0].mxu0
      %v1027 = vadd.f32 %v793, %v1026
      %1028 = vmatprep.mubr.bf16.mxu0 %v729
      %1029 = vmatmul.mubr.bf16.gmra.mrb[0].mxu0 %v728
      %v1030 = vpop.f32.mrb[0].mxu0
      %v1031 = vadd.f32 %v789, %v1030
      %v1032 = vpop.f32.mrb[0].mxu0
      %v1033 = vadd.f32 %v793, %v1032
      %v1034 = vpop.f32.mrb[0].mxu0
      %v1035 = vadd.f32 %v789, %v1034
      %v1036 = vpop.f32.mrb[0].mxu0
      %v1037 = vadd.f32 %v793, %v1036
      %1038 = vmatprep.mubr.bf16.mxu0 %v731
      %1039 = vmatmul.mubr.bf16.gmra.mrb[0].mxu0 %v730
      %v1040 = vpop.f32.mrb[0].mxu0
      %v1041 = vadd.f32 %v789, %v1040
      %v1042 = vpop.f32.mrb[0].mxu0
      %v1043 = vadd.f32 %v793, %v1042
      %v1044 = vpop.f32.mrb[0].mxu0
      %v1045 = vadd.f32 %v789, %v1044
      %v1046 = vpop.f32.mrb[0].mxu0
      %v1047 = vadd.f32 %v793, %v1046
      %1048 = vmatprep.mubr.bf16.mxu0 %v733
      %1049 = vmatmul.mubr.bf16.gmra.mrb[0].mxu0 %v732
      %v1050 = vpop.f32.mrb[0].mxu0
      %v1051 = vadd.f32 %v789, %v1050
      %v1052 = vpop.f32.mrb[0].mxu0
      %v1053 = vadd.f32 %v793, %v1052
      %v1054 = vpop.f32.mrb[0].mxu0
      %v1055 = vadd.f32 %v789, %v1054
      %v1056 = vpop.f32.mrb[0].mxu0
      %v1057 = vadd.f32 %v793, %v1056
      %1058 = vmatprep.mubr.bf16.mxu0 %v735
      %1059 = vmatmul.mubr.bf16.gmra.mrb[0].mxu0 %v734
      %v1060 = vpop.f32.mrb[0].mxu0
      %v1061 = vadd.f32 %v789, %v1060
      %v1062 = vpop.f32.mrb[0].mxu0
      %v1063 = vadd.f32 %v793, %v1062
      %v1064 = vpop.f32.mrb[0].mxu0
      %v1065 = vadd.f32 %v789, %v1064
      %v1066 = vpop.f32.mrb[0].mxu0
      %v1067 = vadd.f32 %v793, %v1066
      %1068 = vmatprep.mubr.bf16.mxu0 %v737
      %1069 = vmatmul.mubr.bf16.gmra.mrb[0].mxu0 %v736
      %v1070 = vpop.f32.mrb[0].mxu0
      %v1071 = vadd.f32 %v789, %v1070
      %v1072 = vpop.f32.mrb[0].mxu0
      %v1073 = vadd.f32 %v793, %v1072
      %v1074 = vpop.f32.mrb[0].mxu0
      %v1075 = vadd.f32 %v789, %v1074
      %v1076 = vpop.f32.mrb[0].mxu0
      %v1077 = vadd.f32 %v793, %v1076
      %1078 = vmatprep.mubr.bf16.mxu0 %v739
      %1079 = vmatmul.mubr.bf16.gmra.mrb[0].mxu0 %v738
      %v1080 = vpop.f32.mrb[0].mxu0
      %v1081 = vadd.f32 %v789, %v1080
      %v1082 = vpop.f32.mrb[0].mxu0
      %v1083 = vadd.f32 %v793, %v1082
      %v1084 = vpop.f32.mrb[0].mxu0
      %v1085 = vadd.f32 %v789, %v1084
      %v1086 = vpop.f32.mrb[0].mxu0
      %v1087 = vadd.f32 %v793, %v1086
      %1088 = vmatprep.mubr.bf16.mxu0 %v741
      %1089 = vmatmul.mubr.bf16.gmra.mrb[0].mxu0 %v740
      %v1090 = vpop.f32.mrb[0].mxu0
      %v1091 = vadd.f32 %v789, %v1090
      %v1092 = vpop.f32.mrb[0].mxu0
      %v1093 = vadd.f32 %v793, %v1092
      %v1094 = vpop.f32.mrb[0].mxu0
      %v1095 = vadd.f32 %v789, %v1094
      %v1096 = vpop.f32.mrb[0].mxu0
      %v1097 = vadd.f32 %v793, %v1096
      %1098 = vmatprep.mubr.bf16.mxu0 %v743
      %1099 = vmatmul.mubr.bf16.gmra.mrb[0].mxu0 %v742
      %v1100 = vpop.f32.mrb[0].mxu0
      %v1101 = vadd.f32 %v789, %v1100
      %v1102 = vpop.f32.mrb[0].mxu0
      %v1103 = vadd.f32 %v793, %v1102
      %v1104 = vpop.f32.mrb[0].mxu0
      %v1105 = vadd.f32 %v789, %v1104
      %v1106 = vpop.f32.mrb[0].mxu0
      %v1107 = vadd.f32 %v793, %v1106
      %1108 = vmatprep.mubr.bf16.mxu0 %v745
      %1109 = vmatmul.mubr.bf16.gmra.mrb[0].mxu0 %v744
      %v1110 = vpop.f32.mrb[0].mxu0
      %v1111 = vadd.f32 %v789, %v1110
      %v1112 = vpop.f32.mrb[0].mxu0
      %v1113 = vadd.f32 %v793, %v1112
      %v1114 = vpop.f32.mrb[0].mxu0
      %v1115 = vadd.f32 %v789, %v1114
      %v1116 = vpop.f32.mrb[0].mxu0
      %v1117 = vadd.f32 %v793, %v1116
      %1118 = vmatprep.mubr.bf16.mxu0 %v747
      %1119 = vmatmul.mubr.bf16.gmra.mrb[0].mxu0 %v746
      %v1120 = vpop.f32.mrb[0].mxu0
      %v1121 = vadd.f32 %v789, %v1120
      %v1122 = vpop.f32.mrb[0].mxu0
      %v1123 = vadd.f32 %v793, %v1122
      %v1124 = vpop.f32.mrb[0].mxu0
      %v1125 = vadd.f32 %v789, %v1124
      %v1126 = vpop.f32.mrb[0].mxu0
      %v1127 = vadd.f32 %v793, %v1126
      %1128 = vmatprep.mubr.bf16.mxu0 %v749
      %1129 = vmatmul.mubr.bf16.gmra.mrb[0].mxu0 %v748
      %v1130 = vpop.f32.mrb[0].mxu0
      %v1131 = vadd.f32 %v789, %v1130
      %v1132 = vpop.f32.mrb[0].mxu0
      %v1133 = vadd.f32 %v793, %v1132
      %v1134 = vpop.f32.mrb[0].mxu0
      %v1135 = vadd.f32 %v789, %v1134
      %v1136 = vpop.f32.mrb[0].mxu0
      %v1137 = vadd.f32 %v793, %v1136
      %1138 = vmatprep.mubr.bf16.mxu0 %v751
      %1139 = vmatmul.mubr.bf16.gmra.mrb[0].mxu0 %v750
      %v1140 = vpop.f32.mrb[0].mxu0
      %v1141 = vadd.f32 %v789, %v1140
      %v1142 = vpop.f32.mrb[0].mxu0
      %v1143 = vadd.f32 %v793, %v1142
      %v1144 = vpop.f32.mrb[0].mxu0
      %v1145 = vadd.f32 %v789, %v1144
      %v1146 = vpop.f32.mrb[0].mxu0
      %v1147 = vadd.f32 %v793, %v1146
      %1148 = vdwg.mxu0
      %v1149 = vmax.f32 %v991, 0.0
      %v1150 = vmax.f32 %v993, 0.0
      %v1151 = vmax.f32 %v995, 0.0
      %v1152 = vmax.f32 %v997, 0.0
      %v1153 = vmax.f32 %v1001, 0.0
      %v1154 = vmax.f32 %v1003, 0.0
      %v1155 = vmax.f32 %v1005, 0.0
      %v1156 = vmax.f32 %v1007, 0.0
      %v1157 = vmax.f32 %v1011, 0.0
      %v1158 = vmax.f32 %v1013, 0.0
      %v1159 = vmax.f32 %v1015, 0.0
      %v1160 = vmax.f32 %v1017, 0.0
      %v1161 = vmax.f32 %v1021, 0.0
      %v1162 = vmax.f32 %v1023, 0.0
      %v1163 = vmax.f32 %v1025, 0.0
      %v1164 = vmax.f32 %v1027, 0.0
      %v1165 = vmax.f32 %v1031, 0.0
      %v1166 = vmax.f32 %v1033, 0.0
      %v1167 = vmax.f32 %v1035, 0.0
      %v1168 = vmax.f32 %v1037, 0.0
      %v1169 = vmax.f32 %v1041, 0.0
      %v1170 = vmax.f32 %v1043, 0.0
      %v1171 = vmax.f32 %v1045, 0.0
      %v1172 = vmax.f32 %v1047, 0.0
      %v1173 = vmax.f32 %v1051, 0.0
      %v1174 = vmax.f32 %v1053, 0.0
      %v1175 = vmax.f32 %v1055, 0.0
      %v1176 = vmax.f32 %v1057, 0.0
      %v1177 = vmax.f32 %v1061, 0.0
      %v1178 = vmax.f32 %v1063, 0.0
      %v1179 = vmax.f32 %v1065, 0.0
      %v1180 = vmax.f32 %v1067, 0.0
      %v1181 = vmax.f32 %v1071, 0.0
      %v1182 = vmax.f32 %v1073, 0.0
      %v1183 = vmax.f32 %v1075, 0.0
      %v1184 = vmax.f32 %v1077, 0.0
      %v1185 = vmax.f32 %v1081, 0.0
      %v1186 = vmax.f32 %v1083, 0.0
      %v1187 = vmax.f32 %v1085, 0.0
      %v1188 = vmax.f32 %v1087, 0.0
      %v1189 = vmax.f32 %v1091, 0.0
      %v1190 = vmax.f32 %v1093, 0.0
      %v1191 = vmax.f32 %v1095, 0.0
      %v1192 = vmax.f32 %v1097, 0.0
      %v1193 = vmax.f32 %v1101, 0.0
      %v1194 = vmax.f32 %v1103, 0.0
      %v1195 = vmax.f32 %v1105, 0.0
      %v1196 = vmax.f32 %v1107, 0.0
      %v1197 = vmax.f32 %v1111, 0.0
      %v1198 = vmax.f32 %v1113, 0.0
      %v1199 = vmax.f32 %v1115, 0.0
      %v1200 = vmax.f32 %v1117, 0.0
      %v1201 = vmax.f32 %v1121, 0.0
      %v1202 = vmax.f32 %v1123, 0.0
      %v1203 = vmax.f32 %v1125, 0.0
      %v1204 = vmax.f32 %v1127, 0.0
      %v1205 = vmax.f32 %v1131, 0.0
      %v1206 = vmax.f32 %v1133, 0.0
      %v1207 = vmax.f32 %v1135, 0.0
      %v1208 = vmax.f32 %v1137, 0.0
      %v1209 = vmax.f32 %v1141, 0.0
      %v1210 = vmax.f32 %v1143, 0.0
      %v1211 = vmax.f32 %v1145, 0.0
      %v1212 = vmax.f32 %v1147, 0.0
      %v1213 = vpack.c.bf16 %v1151, %v1149
      %v1214 = vpack.c.bf16 %v1152, %v1150
      %v1215 = vpack.c.bf16 %v1155, %v1153
      %v1216 = vpack.c.bf16 %v1156, %v1154
      %v1217 = vpack.c.bf16 %v1159, %v1157
      %v1218 = vpack.c.bf16 %v1160, %v1158
      %v1219 = vpack.c.bf16 %v1163, %v1161
      %v1220 = vpack.c.bf16 %v1164, %v1162
      %v1221 = vpack.c.bf16 %v1167, %v1165
      %v1222 = vpack.c.bf16 %v1168, %v1166
      %v1223 = vpack.c.bf16 %v1171, %v1169
      %v1224 = vpack.c.bf16 %v1172, %v1170
      %v1225 = vpack.c.bf16 %v1175, %v1173
      %v1226 = vpack.c.bf16 %v1176, %v1174
      %v1227 = vpack.c.bf16 %v1179, %v1177
      %v1228 = vpack.c.bf16 %v1180, %v1178
      %v1229 = vpack.c.bf16 %v1183, %v1181
      %v1230 = vpack.c.bf16 %v1184, %v1182
      %v1231 = vpack.c.bf16 %v1187, %v1185
      %v1232 = vpack.c.bf16 %v1188, %v1186
      %v1233 = vpack.c.bf16 %v1191, %v1189
      %v1234 = vpack.c.bf16 %v1192, %v1190
      %v1235 = vpack.c.bf16 %v1195, %v1193
      %v1236 = vpack.c.bf16 %v1196, %v1194
      %v1237 = vpack.c.bf16 %v1199, %v1197
      %v1238 = vpack.c.bf16 %v1200, %v1198
      %v1239 = vpack.c.bf16 %v1203, %v1201
      %v1240 = vpack.c.bf16 %v1204, %v1202
      %v1241 = vpack.c.bf16 %v1207, %v1205
      %v1242 = vpack.c.bf16 %v1208, %v1206
      %v1243 = vpack.c.bf16 %v1211, %v1209
      %v1244 = vpack.c.bf16 %v1212, %v1210
      %v1245 = vld [vmem:[%s5] sm:$0xff]
      %v1246 = vld [vmem:[%s5 + $0x8] sm:$0xff]
      %v1247 = vld [vmem:[%s5 + $0x10] sm:$0xff]
      %v1248 = vld [vmem:[%s5 + $0x18] sm:$0xff]
      %v1249 = vld [vmem:[%s5 + $0x20] sm:$0xff]
      %v1250 = vld [vmem:[%s5 + $0x28] sm:$0xff]
      %v1251 = vld [vmem:[%s5 + $0x30] sm:$0xff]
      %v1252 = vld [vmem:[%s5 + $0x38] sm:$0xff]
      %v1253 = vld [vmem:[%s5 + $0x40] sm:$0xff]
      %v1254 = vld [vmem:[%s5 + $0x48] sm:$0xff]
      %v1255 = vld [vmem:[%s5 + $0x50] sm:$0xff]
      %v1256 = vld [vmem:[%s5 + $0x58] sm:$0xff]
      %v1257 = vld [vmem:[%s5 + $0x60] sm:$0xff]
      %v1258 = vld [vmem:[%s5 + $0x68] sm:$0xff]
      %v1259 = vld [vmem:[%s5 + $0x70] sm:$0xff]
      %v1260 = vld [vmem:[%s5 + $0x78] sm:$0xff]
      %v1261 = vld [vmem:[%s5 + $0x80] sm:$0xff]
      %v1262 = vld [vmem:[%s5 + $0x88] sm:$0xff]
      %v1263 = vld [vmem:[%s5 + $0x90] sm:$0xff]
      %v1264 = vld [vmem:[%s5 + $0x98] sm:$0xff]
      %v1265 = vld [vmem:[%s5 + $0xa0] sm:$0xff]
      %v1266 = vld [vmem:[%s5 + $0xa8] sm:$0xff]
      %v1267 = vld [vmem:[%s5 + $0xb0] sm:$0xff]
      %v1268 = vld [vmem:[%s5 + $0xb8] sm:$0xff]
      %v1269 = vld [vmem:[%s5 + $0xc0] sm:$0xff]
      %v1270 = vld [vmem:[%s5 + $0xc8] sm:$0xff]
      %v1271 = vld [vmem:[%s5 + $0xd0] sm:$0xff]
      %v1272 = vld [vmem:[%s5 + $0xd8] sm:$0xff]
      %v1273 = vld [vmem:[%s5 + $0xe0] sm:$0xff]
      %v1274 = vld [vmem:[%s5 + $0xe8] sm:$0xff]
      %v1275 = vld [vmem:[%s5 + $0xf0] sm:$0xff]
      %v1276 = vld [vmem:[%s5 + $0xf8] sm:$0xff]
      %v1277 = vld [vmem:[%s6] sm:$0x3]
      %v1279 = vlaneseq
      %v1280 = vshrl.u32 %v1279, 7
      %v1281 = vsub.s32 0, %v1280
      %v1282 = vrot.slane %v1277, %v1281
      %v1283 = vlaneseq
      %v1284 = vshrl.u32 %v1283, 7
      %v1285 = vsub.s32 1, %v1284
      %v1286 = vrot.slane %v1277, %v1285
      %v1321 = vunpack.c.l.b16 %v1245
      %v1322 = vunpack.c.h.b16 %v1245
      %v1323 = vunpack.c.l.b16 %v1246
      %v1324 = vunpack.c.h.b16 %v1246
      %v1325 = vunpack.c.l.b16 %v1247
      %v1326 = vunpack.c.h.b16 %v1247
      %v1327 = vunpack.c.l.b16 %v1248
      %v1328 = vunpack.c.h.b16 %v1248
      %v1329 = vunpack.c.l.b16 %v1249
      %v1330 = vunpack.c.h.b16 %v1249
      %v1331 = vunpack.c.l.b16 %v1250
      %v1332 = vunpack.c.h.b16 %v1250
      %v1333 = vunpack.c.l.b16 %v1251
      %v1334 = vunpack.c.h.b16 %v1251
      %v1335 = vunpack.c.l.b16 %v1252
      %v1336 = vunpack.c.h.b16 %v1252
      %v1337 = vunpack.c.l.b16 %v1253
      %v1338 = vunpack.c.h.b16 %v1253
      %v1339 = vunpack.c.l.b16 %v1254
      %v1340 = vunpack.c.h.b16 %v1254
      %v1341 = vunpack.c.l.b16 %v1255
      %v1342 = vunpack.c.h.b16 %v1255
      %v1343 = vunpack.c.l.b16 %v1256
      %v1344 = vunpack.c.h.b16 %v1256
      %v1345 = vunpack.c.l.b16 %v1257
      %v1346 = vunpack.c.h.b16 %v1257
      %v1347 = vunpack.c.l.b16 %v1258
      %v1348 = vunpack.c.h.b16 %v1258
      %v1349 = vunpack.c.l.b16 %v1259
      %v1350 = vunpack.c.h.b16 %v1259
      %v1351 = vunpack.c.l.b16 %v1260
      %v1352 = vunpack.c.h.b16 %v1260
      %v1353 = vunpack.c.l.b16 %v1261
      %v1354 = vunpack.c.h.b16 %v1261
      %v1355 = vunpack.c.l.b16 %v1262
      %v1356 = vunpack.c.h.b16 %v1262
      %v1357 = vunpack.c.l.b16 %v1263
      %v1358 = vunpack.c.h.b16 %v1263
      %v1359 = vunpack.c.l.b16 %v1264
      %v1360 = vunpack.c.h.b16 %v1264
      %v1361 = vunpack.c.l.b16 %v1265
      %v1362 = vunpack.c.h.b16 %v1265
      %v1363 = vunpack.c.l.b16 %v1266
      %v1364 = vunpack.c.h.b16 %v1266
      %v1365 = vunpack.c.l.b16 %v1267
      %v1366 = vunpack.c.h.b16 %v1267
      %v1367 = vunpack.c.l.b16 %v1268
      %v1368 = vunpack.c.h.b16 %v1268
      %v1369 = vunpack.c.l.b16 %v1269
      %v1370 = vunpack.c.h.b16 %v1269
      %v1371 = vunpack.c.l.b16 %v1270
      %v1372 = vunpack.c.h.b16 %v1270
      %v1373 = vunpack.c.l.b16 %v1271
      %v1374 = vunpack.c.h.b16 %v1271
      %v1375 = vunpack.c.l.b16 %v1272
      %v1376 = vunpack.c.h.b16 %v1272
      %v1377 = vunpack.c.l.b16 %v1273
      %v1378 = vunpack.c.h.b16 %v1273
      %v1379 = vunpack.c.l.b16 %v1274
      %v1380 = vunpack.c.h.b16 %v1274
      %v1381 = vunpack.c.l.b16 %v1275
      %v1382 = vunpack.c.h.b16 %v1275
      %v1383 = vunpack.c.l.b16 %v1276
      %v1384 = vunpack.c.h.b16 %v1276
      %v1385 = vpack.c.b16 %v1323, %v1321
      %v1386 = vpack.c.b16 %v1324, %v1322
      %v1387 = vpack.c.b16 %v1327, %v1325
      %v1388 = vpack.c.b16 %v1328, %v1326
      %v1389 = vpack.c.b16 %v1331, %v1329
      %v1390 = vpack.c.b16 %v1332, %v1330
      %v1391 = vpack.c.b16 %v1335, %v1333
      %v1392 = vpack.c.b16 %v1336, %v1334
      %v1393 = vpack.c.b16 %v1339, %v1337
      %v1394 = vpack.c.b16 %v1340, %v1338
      %v1395 = vpack.c.b16 %v1343, %v1341
      %v1396 = vpack.c.b16 %v1344, %v1342
      %v1397 = vpack.c.b16 %v1347, %v1345
      %v1398 = vpack.c.b16 %v1348, %v1346
      %v1399 = vpack.c.b16 %v1351, %v1349
      %v1400 = vpack.c.b16 %v1352, %v1350
      %v1401 = vpack.c.b16 %v1355, %v1353
      %v1402 = vpack.c.b16 %v1356, %v1354
      %v1403 = vpack.c.b16 %v1359, %v1357
      %v1404 = vpack.c.b16 %v1360, %v1358
      %v1405 = vpack.c.b16 %v1363, %v1361
      %v1406 = vpack.c.b16 %v1364, %v1362
      %v1407 = vpack.c.b16 %v1367, %v1365
      %v1408 = vpack.c.b16 %v1368, %v1366
      %v1409 = vpack.c.b16 %v1371, %v1369
      %v1410 = vpack.c.b16 %v1372, %v1370
      %v1411 = vpack.c.b16 %v1375, %v1373
      %v1412 = vpack.c.b16 %v1376, %v1374
      %v1413 = vpack.c.b16 %v1379, %v1377
      %v1414 = vpack.c.b16 %v1380, %v1378
      %v1415 = vpack.c.b16 %v1383, %v1381
      %v1416 = vpack.c.b16 %v1384, %v1382
      %1449 = vmatprep.subr.bf16.mxu0 %v1386
      %1450 = vmatpush1.bf16.msra.mxu0 %v1385
      %1451 = vmatprep.subr.bf16.mxu0 %v1388
      %1452 = vmatpush1.bf16.msra.mxu0 %v1387
      %1453 = vmatprep.subr.bf16.mxu0 %v1390
      %1454 = vmatpush1.bf16.msra.mxu0 %v1389
      %1455 = vmatprep.subr.bf16.mxu0 %v1392
      %1456 = vmatpush1.bf16.msra.mxu0 %v1391
      %1457 = vmatprep.subr.bf16.mxu0 %v1394
      %1458 = vmatpush1.bf16.msra.mxu0 %v1393
      %1459 = vmatprep.subr.bf16.mxu0 %v1396
      %1460 = vmatpush1.bf16.msra.mxu0 %v1395
      %1461 = vmatprep.subr.bf16.mxu0 %v1398
      %1462 = vmatpush1.bf16.msra.mxu0 %v1397
      %1463 = vmatprep.subr.bf16.mxu0 %v1400
      %1464 = vmatpush1.bf16.msra.mxu0 %v1399
      %1465 = vmatprep.subr.bf16.mxu0 %v1402
      %1466 = vmatpush1.bf16.msra.mxu0 %v1401
      %1467 = vmatprep.subr.bf16.mxu0 %v1404
      %1468 = vmatpush1.bf16.msra.mxu0 %v1403
      %1469 = vmatprep.subr.bf16.mxu0 %v1406
      %1470 = vmatpush1.bf16.msra.mxu0 %v1405
      %1471 = vmatprep.subr.bf16.mxu0 %v1408
      %1472 = vmatpush1.bf16.msra.mxu0 %v1407
      %1473 = vmatprep.subr.bf16.mxu0 %v1410
      %1474 = vmatpush1.bf16.msra.mxu0 %v1409
      %1475 = vmatprep.subr.bf16.mxu0 %v1412
      %1476 = vmatpush1.bf16.msra.mxu0 %v1411
      %1477 = vmatprep.subr.bf16.mxu0 %v1414
      %1478 = vmatpush1.bf16.msra.mxu0 %v1413
      %1479 = vmatprep.subr.bf16.mxu0 %v1416
      %1480 = vmatpush1.bf16.msra.mxu0 %v1415
      %1481 = vmatprep.mubr.bf16.mxu0 %v1214
      %1482 = vmatmul.mubr.bf16.gmra.mrb[0].mxu0 %v1213
      %v1483 = vpop.f32.mrb[0].mxu0
      %v1484 = vadd.f32 %v1282, %v1483
      %v1485 = vpop.f32.mrb[0].mxu0
      %v1486 = vadd.f32 %v1286, %v1485
      %v1487 = vpop.f32.mrb[0].mxu0
      %v1488 = vadd.f32 %v1282, %v1487
      %v1489 = vpop.f32.mrb[0].mxu0
      %v1490 = vadd.f32 %v1286, %v1489
      %1491 = vmatprep.mubr.bf16.mxu0 %v1216
      %1492 = vmatmul.mubr.bf16.gmra.mrb[0].mxu0 %v1215
      %v1493 = vpop.f32.mrb[0].mxu0
      %v1494 = vadd.f32 %v1282, %v1493
      %v1495 = vpop.f32.mrb[0].mxu0
      %v1496 = vadd.f32 %v1286, %v1495
      %v1497 = vpop.f32.mrb[0].mxu0
      %v1498 = vadd.f32 %v1282, %v1497
      %v1499 = vpop.f32.mrb[0].mxu0
      %v1500 = vadd.f32 %v1286, %v1499
      %1501 = vmatprep.mubr.bf16.mxu0 %v1218
      %1502 = vmatmul.mubr.bf16.gmra.mrb[0].mxu0 %v1217
      %v1503 = vpop.f32.mrb[0].mxu0
      %v1504 = vadd.f32 %v1282, %v1503
      %v1505 = vpop.f32.mrb[0].mxu0
      %v1506 = vadd.f32 %v1286, %v1505
      %v1507 = vpop.f32.mrb[0].mxu0
      %v1508 = vadd.f32 %v1282, %v1507
      %v1509 = vpop.f32.mrb[0].mxu0
      %v1510 = vadd.f32 %v1286, %v1509
      %1511 = vmatprep.mubr.bf16.mxu0 %v1220
      %1512 = vmatmul.mubr.bf16.gmra.mrb[0].mxu0 %v1219
      %v1513 = vpop.f32.mrb[0].mxu0
      %v1514 = vadd.f32 %v1282, %v1513
      %v1515 = vpop.f32.mrb[0].mxu0
      %v1516 = vadd.f32 %v1286, %v1515
      %v1517 = vpop.f32.mrb[0].mxu0
      %v1518 = vadd.f32 %v1282, %v1517
      %v1519 = vpop.f32.mrb[0].mxu0
      %v1520 = vadd.f32 %v1286, %v1519
      %1521 = vmatprep.mubr.bf16.mxu0 %v1222
      %1522 = vmatmul.mubr.bf16.gmra.mrb[0].mxu0 %v1221
      %v1523 = vpop.f32.mrb[0].mxu0
      %v1524 = vadd.f32 %v1282, %v1523
      %v1525 = vpop.f32.mrb[0].mxu0
      %v1526 = vadd.f32 %v1286, %v1525
      %v1527 = vpop.f32.mrb[0].mxu0
      %v1528 = vadd.f32 %v1282, %v1527
      %v1529 = vpop.f32.mrb[0].mxu0
      %v1530 = vadd.f32 %v1286, %v1529
      %1531 = vmatprep.mubr.bf16.mxu0 %v1224
      %1532 = vmatmul.mubr.bf16.gmra.mrb[0].mxu0 %v1223
      %v1533 = vpop.f32.mrb[0].mxu0
      %v1534 = vadd.f32 %v1282, %v1533
      %v1535 = vpop.f32.mrb[0].mxu0
      %v1536 = vadd.f32 %v1286, %v1535
      %v1537 = vpop.f32.mrb[0].mxu0
      %v1538 = vadd.f32 %v1282, %v1537
      %v1539 = vpop.f32.mrb[0].mxu0
      %v1540 = vadd.f32 %v1286, %v1539
      %1541 = vmatprep.mubr.bf16.mxu0 %v1226
      %1542 = vmatmul.mubr.bf16.gmra.mrb[0].mxu0 %v1225
      %v1543 = vpop.f32.mrb[0].mxu0
      %v1544 = vadd.f32 %v1282, %v1543
      %v1545 = vpop.f32.mrb[0].mxu0
      %v1546 = vadd.f32 %v1286, %v1545
      %v1547 = vpop.f32.mrb[0].mxu0
      %v1548 = vadd.f32 %v1282, %v1547
      %v1549 = vpop.f32.mrb[0].mxu0
      %v1550 = vadd.f32 %v1286, %v1549
      %1551 = vmatprep.mubr.bf16.mxu0 %v1228
      %1552 = vmatmul.mubr.bf16.gmra.mrb[0].mxu0 %v1227
      %v1553 = vpop.f32.mrb[0].mxu0
      %v1554 = vadd.f32 %v1282, %v1553
      %v1555 = vpop.f32.mrb[0].mxu0
      %v1556 = vadd.f32 %v1286, %v1555
      %v1557 = vpop.f32.mrb[0].mxu0
      %v1558 = vadd.f32 %v1282, %v1557
      %v1559 = vpop.f32.mrb[0].mxu0
      %v1560 = vadd.f32 %v1286, %v1559
      %1561 = vmatprep.mubr.bf16.mxu0 %v1230
      %1562 = vmatmul.mubr.bf16.gmra.mrb[0].mxu0 %v1229
      %v1563 = vpop.f32.mrb[0].mxu0
      %v1564 = vadd.f32 %v1282, %v1563
      %v1565 = vpop.f32.mrb[0].mxu0
      %v1566 = vadd.f32 %v1286, %v1565
      %v1567 = vpop.f32.mrb[0].mxu0
      %v1568 = vadd.f32 %v1282, %v1567
      %v1569 = vpop.f32.mrb[0].mxu0
      %v1570 = vadd.f32 %v1286, %v1569
      %1571 = vmatprep.mubr.bf16.mxu0 %v1232
      %1572 = vmatmul.mubr.bf16.gmra.mrb[0].mxu0 %v1231
      %v1573 = vpop.f32.mrb[0].mxu0
      %v1574 = vadd.f32 %v1282, %v1573
      %v1575 = vpop.f32.mrb[0].mxu0
      %v1576 = vadd.f32 %v1286, %v1575
      %v1577 = vpop.f32.mrb[0].mxu0
      %v1578 = vadd.f32 %v1282, %v1577
      %v1579 = vpop.f32.mrb[0].mxu0
      %v1580 = vadd.f32 %v1286, %v1579
      %1581 = vmatprep.mubr.bf16.mxu0 %v1234
      %1582 = vmatmul.mubr.bf16.gmra.mrb[0].mxu0 %v1233
      %v1583 = vpop.f32.mrb[0].mxu0
      %v1584 = vadd.f32 %v1282, %v1583
      %v1585 = vpop.f32.mrb[0].mxu0
      %v1586 = vadd.f32 %v1286, %v1585
      %v1587 = vpop.f32.mrb[0].mxu0
      %v1588 = vadd.f32 %v1282, %v1587
      %v1589 = vpop.f32.mrb[0].mxu0
      %v1590 = vadd.f32 %v1286, %v1589
      %1591 = vmatprep.mubr.bf16.mxu0 %v1236
      %1592 = vmatmul.mubr.bf16.gmra.mrb[0].mxu0 %v1235
      %v1593 = vpop.f32.mrb[0].mxu0
      %v1594 = vadd.f32 %v1282, %v1593
      %v1595 = vpop.f32.mrb[0].mxu0
      %v1596 = vadd.f32 %v1286, %v1595
      %v1597 = vpop.f32.mrb[0].mxu0
      %v1598 = vadd.f32 %v1282, %v1597
      %v1599 = vpop.f32.mrb[0].mxu0
      %v1600 = vadd.f32 %v1286, %v1599
      %1601 = vmatprep.mubr.bf16.mxu0 %v1238
      %1602 = vmatmul.mubr.bf16.gmra.mrb[0].mxu0 %v1237
      %v1603 = vpop.f32.mrb[0].mxu0
      %v1604 = vadd.f32 %v1282, %v1603
      %v1605 = vpop.f32.mrb[0].mxu0
      %v1606 = vadd.f32 %v1286, %v1605
      %v1607 = vpop.f32.mrb[0].mxu0
      %v1608 = vadd.f32 %v1282, %v1607
      %v1609 = vpop.f32.mrb[0].mxu0
      %v1610 = vadd.f32 %v1286, %v1609
      %1611 = vmatprep.mubr.bf16.mxu0 %v1240
      %1612 = vmatmul.mubr.bf16.gmra.mrb[0].mxu0 %v1239
      %v1613 = vpop.f32.mrb[0].mxu0
      %v1614 = vadd.f32 %v1282, %v1613
      %v1615 = vpop.f32.mrb[0].mxu0
      %v1616 = vadd.f32 %v1286, %v1615
      %v1617 = vpop.f32.mrb[0].mxu0
      %v1618 = vadd.f32 %v1282, %v1617
      %v1619 = vpop.f32.mrb[0].mxu0
      %v1620 = vadd.f32 %v1286, %v1619
      %1621 = vmatprep.mubr.bf16.mxu0 %v1242
      %1622 = vmatmul.mubr.bf16.gmra.mrb[0].mxu0 %v1241
      %v1623 = vpop.f32.mrb[0].mxu0
      %v1624 = vadd.f32 %v1282, %v1623
      %v1625 = vpop.f32.mrb[0].mxu0
      %v1626 = vadd.f32 %v1286, %v1625
      %v1627 = vpop.f32.mrb[0].mxu0
      %v1628 = vadd.f32 %v1282, %v1627
      %v1629 = vpop.f32.mrb[0].mxu0
      %v1630 = vadd.f32 %v1286, %v1629
      %1631 = vmatprep.mubr.bf16.mxu0 %v1244
      %1632 = vmatmul.mubr.bf16.gmra.mrb[0].mxu0 %v1243
      %v1633 = vpop.f32.mrb[0].mxu0
      %v1634 = vadd.f32 %v1282, %v1633
      %v1635 = vpop.f32.mrb[0].mxu0
      %v1636 = vadd.f32 %v1286, %v1635
      %v1637 = vpop.f32.mrb[0].mxu0
      %v1638 = vadd.f32 %v1282, %v1637
      %v1639 = vpop.f32.mrb[0].mxu0
      %v1640 = vadd.f32 %v1286, %v1639
      %1641 = vdwg.mxu0
      %v1642 = vadd.f32 %v656, %v1484
      %v1643 = vadd.f32 %v657, %v1486
      %v1644 = vadd.f32 %v658, %v1488
      %v1645 = vadd.f32 %v659, %v1490
      %v1646 = vadd.f32 %v660, %v1494
      %v1647 = vadd.f32 %v661, %v1496
      %v1648 = vadd.f32 %v662, %v1498
      %v1649 = vadd.f32 %v663, %v1500
      %v1650 = vadd.f32 %v664, %v1504
      %v1651 = vadd.f32 %v665, %v1506
      %v1652 = vadd.f32 %v666, %v1508
      %v1653 = vadd.f32 %v667, %v1510
      %v1654 = vadd.f32 %v668, %v1514
      %v1655 = vadd.f32 %v669, %v1516
      %v1656 = vadd.f32 %v670, %v1518
      %v1657 = vadd.f32 %v671, %v1520
      %v1658 = vadd.f32 %v672, %v1524
      %v1659 = vadd.f32 %v673, %v1526
      %v1660 = vadd.f32 %v674, %v1528
      %v1661 = vadd.f32 %v675, %v1530
      %v1662 = vadd.f32 %v676, %v1534
      %v1663 = vadd.f32 %v677, %v1536
      %v1664 = vadd.f32 %v678, %v1538
      %v1665 = vadd.f32 %v679, %v1540
      %v1666 = vadd.f32 %v680, %v1544
      %v1667 = vadd.f32 %v681, %v1546
      %v1668 = vadd.f32 %v682, %v1548
      %v1669 = vadd.f32 %v683, %v1550
      %v1670 = vadd.f32 %v684, %v1554
      %v1671 = vadd.f32 %v685, %v1556
      %v1672 = vadd.f32 %v686, %v1558
      %v1673 = vadd.f32 %v687, %v1560
      %v1674 = vadd.f32 %v688, %v1564
      %v1675 = vadd.f32 %v689, %v1566
      %v1676 = vadd.f32 %v690, %v1568
      %v1677 = vadd.f32 %v691, %v1570
      %v1678 = vadd.f32 %v692, %v1574
      %v1679 = vadd.f32 %v693, %v1576
      %v1680 = vadd.f32 %v694, %v1578
      %v1681 = vadd.f32 %v695, %v1580
      %v1682 = vadd.f32 %v696, %v1584
      %v1683 = vadd.f32 %v697, %v1586
      %v1684 = vadd.f32 %v698, %v1588
      %v1685 = vadd.f32 %v699, %v1590
      %v1686 = vadd.f32 %v700, %v1594
      %v1687 = vadd.f32 %v701, %v1596
      %v1688 = vadd.f32 %v702, %v1598
      %v1689 = vadd.f32 %v703, %v1600
      %v1690 = vadd.f32 %v704, %v1604
      %v1691 = vadd.f32 %v705, %v1606
      %v1692 = vadd.f32 %v706, %v1608
      %v1693 = vadd.f32 %v707, %v1610
      %v1694 = vadd.f32 %v708, %v1614
      %v1695 = vadd.f32 %v709, %v1616
      %v1696 = vadd.f32 %v710, %v1618
      %v1697 = vadd.f32 %v711, %v1620
      %v1698 = vadd.f32 %v712, %v1624
      %v1699 = vadd.f32 %v713, %v1626
      %v1700 = vadd.f32 %v714, %v1628
      %v1701 = vadd.f32 %v715, %v1630
      %v1702 = vadd.f32 %v716, %v1634
      %v1703 = vadd.f32 %v717, %v1636
      %v1704 = vadd.f32 %v718, %v1638
      %v1705 = vadd.f32 %v719, %v1640
      %v1706 = vmax.f32 %v1642, 0.0
      %v1707 = vmax.f32 %v1643, 0.0
      %v1708 = vmax.f32 %v1644, 0.0
      %v1709 = vmax.f32 %v1645, 0.0
      %v1710 = vmax.f32 %v1646, 0.0
      %v1711 = vmax.f32 %v1647, 0.0
      %v1712 = vmax.f32 %v1648, 0.0
      %v1713 = vmax.f32 %v1649, 0.0
      %v1714 = vmax.f32 %v1650, 0.0
      %v1715 = vmax.f32 %v1651, 0.0
      %v1716 = vmax.f32 %v1652, 0.0
      %v1717 = vmax.f32 %v1653, 0.0
      %v1718 = vmax.f32 %v1654, 0.0
      %v1719 = vmax.f32 %v1655, 0.0
      %v1720 = vmax.f32 %v1656, 0.0
      %v1721 = vmax.f32 %v1657, 0.0
      %v1722 = vmax.f32 %v1658, 0.0
      %v1723 = vmax.f32 %v1659, 0.0
      %v1724 = vmax.f32 %v1660, 0.0
      %v1725 = vmax.f32 %v1661, 0.0
      %v1726 = vmax.f32 %v1662, 0.0
      %v1727 = vmax.f32 %v1663, 0.0
      %v1728 = vmax.f32 %v1664, 0.0
      %v1729 = vmax.f32 %v1665, 0.0
      %v1730 = vmax.f32 %v1666, 0.0
      %v1731 = vmax.f32 %v1667, 0.0
      %v1732 = vmax.f32 %v1668, 0.0
      %v1733 = vmax.f32 %v1669, 0.0
      %v1734 = vmax.f32 %v1670, 0.0
      %v1735 = vmax.f32 %v1671, 0.0
      %v1736 = vmax.f32 %v1672, 0.0
      %v1737 = vmax.f32 %v1673, 0.0
      %v1738 = vmax.f32 %v1674, 0.0
      %v1739 = vmax.f32 %v1675, 0.0
      %v1740 = vmax.f32 %v1676, 0.0
      %v1741 = vmax.f32 %v1677, 0.0
      %v1742 = vmax.f32 %v1678, 0.0
      %v1743 = vmax.f32 %v1679, 0.0
      %v1744 = vmax.f32 %v1680, 0.0
      %v1745 = vmax.f32 %v1681, 0.0
      %v1746 = vmax.f32 %v1682, 0.0
      %v1747 = vmax.f32 %v1683, 0.0
      %v1748 = vmax.f32 %v1684, 0.0
      %v1749 = vmax.f32 %v1685, 0.0
      %v1750 = vmax.f32 %v1686, 0.0
      %v1751 = vmax.f32 %v1687, 0.0
      %v1752 = vmax.f32 %v1688, 0.0
      %v1753 = vmax.f32 %v1689, 0.0
      %v1754 = vmax.f32 %v1690, 0.0
      %v1755 = vmax.f32 %v1691, 0.0
      %v1756 = vmax.f32 %v1692, 0.0
      %v1757 = vmax.f32 %v1693, 0.0
      %v1758 = vmax.f32 %v1694, 0.0
      %v1759 = vmax.f32 %v1695, 0.0
      %v1760 = vmax.f32 %v1696, 0.0
      %v1761 = vmax.f32 %v1697, 0.0
      %v1762 = vmax.f32 %v1698, 0.0
      %v1763 = vmax.f32 %v1699, 0.0
      %v1764 = vmax.f32 %v1700, 0.0
      %v1765 = vmax.f32 %v1701, 0.0
      %v1766 = vmax.f32 %v1702, 0.0
      %v1767 = vmax.f32 %v1703, 0.0
      %v1768 = vmax.f32 %v1704, 0.0
      %v1769 = vmax.f32 %v1705, 0.0
      %v1770 = vpack.c.bf16 %v1708, %v1706
      %v1771 = vpack.c.bf16 %v1709, %v1707
      %v1772 = vpack.c.bf16 %v1712, %v1710
      %v1773 = vpack.c.bf16 %v1713, %v1711
      %v1774 = vpack.c.bf16 %v1716, %v1714
      %v1775 = vpack.c.bf16 %v1717, %v1715
      %v1776 = vpack.c.bf16 %v1720, %v1718
      %v1777 = vpack.c.bf16 %v1721, %v1719
      %v1778 = vpack.c.bf16 %v1724, %v1722
      %v1779 = vpack.c.bf16 %v1725, %v1723
      %v1780 = vpack.c.bf16 %v1728, %v1726
      %v1781 = vpack.c.bf16 %v1729, %v1727
      %v1782 = vpack.c.bf16 %v1732, %v1730
      %v1783 = vpack.c.bf16 %v1733, %v1731
      %v1784 = vpack.c.bf16 %v1736, %v1734
      %v1785 = vpack.c.bf16 %v1737, %v1735
      %v1786 = vpack.c.bf16 %v1740, %v1738
      %v1787 = vpack.c.bf16 %v1741, %v1739
      %v1788 = vpack.c.bf16 %v1744, %v1742
      %v1789 = vpack.c.bf16 %v1745, %v1743
      %v1790 = vpack.c.bf16 %v1748, %v1746
      %v1791 = vpack.c.bf16 %v1749, %v1747
      %v1792 = vpack.c.bf16 %v1752, %v1750
      %v1793 = vpack.c.bf16 %v1753, %v1751
      %v1794 = vpack.c.bf16 %v1756, %v1754
      %v1795 = vpack.c.bf16 %v1757, %v1755
      %v1796 = vpack.c.bf16 %v1760, %v1758
      %v1797 = vpack.c.bf16 %v1761, %v1759
      %v1798 = vpack.c.bf16 %v1764, %v1762
      %v1799 = vpack.c.bf16 %v1765, %v1763
      %v1800 = vpack.c.bf16 %v1768, %v1766
      %v1801 = vpack.c.bf16 %v1769, %v1767
      %v1802 = vld [vmem:[%s7] sm:$0xf]
      %v1803 = vld [vmem:[%s7 + $0x4] sm:$0xf]
      %v1804 = vld [vmem:[%s7 + $0x8] sm:$0xf]
      %v1805 = vld [vmem:[%s7 + $0xc] sm:$0xf]
      %v1806 = vld [vmem:[%s7 + $0x10] sm:$0xf]
      %v1807 = vld [vmem:[%s7 + $0x14] sm:$0xf]
      %v1808 = vld [vmem:[%s7 + $0x18] sm:$0xf]
      %v1809 = vld [vmem:[%s7 + $0x1c] sm:$0xf]
      %v1810 = vld [vmem:[%s7 + $0x20] sm:$0xf]
      %v1811 = vld [vmem:[%s7 + $0x24] sm:$0xf]
      %v1812 = vld [vmem:[%s7 + $0x28] sm:$0xf]
      %v1813 = vld [vmem:[%s7 + $0x2c] sm:$0xf]
      %v1814 = vld [vmem:[%s7 + $0x30] sm:$0xf]
      %v1815 = vld [vmem:[%s7 + $0x34] sm:$0xf]
      %v1816 = vld [vmem:[%s7 + $0x38] sm:$0xf]
      %v1817 = vld [vmem:[%s7 + $0x3c] sm:$0xf]
      %v1818 = vld [vmem:[%s7 + $0x40] sm:$0xf]
      %v1819 = vld [vmem:[%s7 + $0x44] sm:$0xf]
      %v1820 = vld [vmem:[%s7 + $0x48] sm:$0xf]
      %v1821 = vld [vmem:[%s7 + $0x4c] sm:$0xf]
      %v1822 = vld [vmem:[%s7 + $0x50] sm:$0xf]
      %v1823 = vld [vmem:[%s7 + $0x54] sm:$0xf]
      %v1824 = vld [vmem:[%s7 + $0x58] sm:$0xf]
      %v1825 = vld [vmem:[%s7 + $0x5c] sm:$0xf]
      %v1826 = vld [vmem:[%s7 + $0x60] sm:$0xf]
      %v1827 = vld [vmem:[%s7 + $0x64] sm:$0xf]
      %v1828 = vld [vmem:[%s7 + $0x68] sm:$0xf]
      %v1829 = vld [vmem:[%s7 + $0x6c] sm:$0xf]
      %v1830 = vld [vmem:[%s7 + $0x70] sm:$0xf]
      %v1831 = vld [vmem:[%s7 + $0x74] sm:$0xf]
      %v1832 = vld [vmem:[%s7 + $0x78] sm:$0xf]
      %v1833 = vld [vmem:[%s7 + $0x7c] sm:$0xf]
      %v1834 = vld [vmem:[%s8] sm:$0x1]
      %v1836 = vlaneseq
      %v1837 = vshrl.u32 %v1836, 7
      %v1838 = vsub.s32 0, %v1837
      %v1839 = vrot.slane %v1834, %v1838
      %v1873 = vunpack.c.l.b16 %v1802
      %v1874 = vunpack.c.l.b16 %v1803
      %v1875 = vunpack.c.l.b16 %v1804
      %v1876 = vunpack.c.l.b16 %v1805
      %v1877 = vunpack.c.l.b16 %v1806
      %v1878 = vunpack.c.l.b16 %v1807
      %v1879 = vunpack.c.l.b16 %v1808
      %v1880 = vunpack.c.l.b16 %v1809
      %v1881 = vunpack.c.l.b16 %v1810
      %v1882 = vunpack.c.l.b16 %v1811
      %v1883 = vunpack.c.l.b16 %v1812
      %v1884 = vunpack.c.l.b16 %v1813
      %v1885 = vunpack.c.l.b16 %v1814
      %v1886 = vunpack.c.l.b16 %v1815
      %v1887 = vunpack.c.l.b16 %v1816
      %v1888 = vunpack.c.l.b16 %v1817
      %v1889 = vunpack.c.l.b16 %v1818
      %v1890 = vunpack.c.l.b16 %v1819
      %v1891 = vunpack.c.l.b16 %v1820
      %v1892 = vunpack.c.l.b16 %v1821
      %v1893 = vunpack.c.l.b16 %v1822
      %v1894 = vunpack.c.l.b16 %v1823
      %v1895 = vunpack.c.l.b16 %v1824
      %v1896 = vunpack.c.l.b16 %v1825
      %v1897 = vunpack.c.l.b16 %v1826
      %v1898 = vunpack.c.l.b16 %v1827
      %v1899 = vunpack.c.l.b16 %v1828
      %v1900 = vunpack.c.l.b16 %v1829
      %v1901 = vunpack.c.l.b16 %v1830
      %v1902 = vunpack.c.l.b16 %v1831
      %v1903 = vunpack.c.l.b16 %v1832
      %v1904 = vunpack.c.l.b16 %v1833
      %v1905 = vpack.c.b16 %v1874, %v1873
      %v1906 = vpack.c.b16 %v1876, %v1875
      %v1907 = vpack.c.b16 %v1878, %v1877
      %v1908 = vpack.c.b16 %v1880, %v1879
      %v1909 = vpack.c.b16 %v1882, %v1881
      %v1910 = vpack.c.b16 %v1884, %v1883
      %v1911 = vpack.c.b16 %v1886, %v1885
      %v1912 = vpack.c.b16 %v1888, %v1887
      %v1913 = vpack.c.b16 %v1890, %v1889
      %v1914 = vpack.c.b16 %v1892, %v1891
      %v1915 = vpack.c.b16 %v1894, %v1893
      %v1916 = vpack.c.b16 %v1896, %v1895
      %v1917 = vpack.c.b16 %v1898, %v1897
      %v1918 = vpack.c.b16 %v1900, %v1899
      %v1919 = vpack.c.b16 %v1902, %v1901
      %v1920 = vpack.c.b16 %v1904, %v1903
      %1937 = vmatprep.subr.bf16.mxu0 0
      %1938 = vmatpush1.bf16.msra.mxu0 %v1905
      %1939 = vmatprep.subr.bf16.mxu0 0
      %1940 = vmatpush1.bf16.msra.mxu0 %v1906
      %1941 = vmatprep.subr.bf16.mxu0 0
      %1942 = vmatpush1.bf16.msra.mxu0 %v1907
      %1943 = vmatprep.subr.bf16.mxu0 0
      %1944 = vmatpush1.bf16.msra.mxu0 %v1908
      %1945 = vmatprep.subr.bf16.mxu0 0
      %1946 = vmatpush1.bf16.msra.mxu0 %v1909
      %1947 = vmatprep.subr.bf16.mxu0 0
      %1948 = vmatpush1.bf16.msra.mxu0 %v1910
      %1949 = vmatprep.subr.bf16.mxu0 0
      %1950 = vmatpush1.bf16.msra.mxu0 %v1911
      %1951 = vmatprep.subr.bf16.mxu0 0
      %1952 = vmatpush1.bf16.msra.mxu0 %v1912
      %1953 = vmatprep.subr.bf16.mxu0 0
      %1954 = vmatpush1.bf16.msra.mxu0 %v1913
      %1955 = vmatprep.subr.bf16.mxu0 0
      %1956 = vmatpush1.bf16.msra.mxu0 %v1914
      %1957 = vmatprep.subr.bf16.mxu0 0
      %1958 = vmatpush1.bf16.msra.mxu0 %v1915
      %1959 = vmatprep.subr.bf16.mxu0 0
      %1960 = vmatpush1.bf16.msra.mxu0 %v1916
      %1961 = vmatprep.subr.bf16.mxu0 0
      %1962 = vmatpush1.bf16.msra.mxu0 %v1917
      %1963 = vmatprep.subr.bf16.mxu0 0
      %1964 = vmatpush1.bf16.msra.mxu0 %v1918
      %1965 = vmatprep.subr.bf16.mxu0 0
      %1966 = vmatpush1.bf16.msra.mxu0 %v1919
      %1967 = vmatprep.subr.bf16.mxu0 0
      %1968 = vmatpush1.bf16.msra.mxu0 %v1920
      %1969 = vmatprep.mubr.bf16.mxu0 %v1771
      %1970 = vmatmul.mubr.bf16.gmra.mrb[0].mxu0 %v1770
      %v1971 = vpop.f32.mrb[0].mxu0
      %v1972 = vadd.f32 %v1839, %v1971
      %v1973 = vpop.f32.mrb[0].mxu0
      %v1974 = vpop.f32.mrb[0].mxu0
      %v1975 = vadd.f32 %v1839, %v1974
      %v1976 = vpop.f32.mrb[0].mxu0
      %1977 = vmatprep.mubr.bf16.mxu0 %v1773
      %1978 = vmatmul.mubr.bf16.gmra.mrb[0].mxu0 %v1772
      %v1979 = vpop.f32.mrb[0].mxu0
      %v1980 = vadd.f32 %v1839, %v1979
      %v1981 = vpop.f32.mrb[0].mxu0
      %v1982 = vpop.f32.mrb[0].mxu0
      %v1983 = vadd.f32 %v1839, %v1982
      %v1984 = vpop.f32.mrb[0].mxu0
      %1985 = vmatprep.mubr.bf16.mxu0 %v1775
      %1986 = vmatmul.mubr.bf16.gmra.mrb[0].mxu0 %v1774
      %v1987 = vpop.f32.mrb[0].mxu0
      %v1988 = vadd.f32 %v1839, %v1987
      %v1989 = vpop.f32.mrb[0].mxu0
      %v1990 = vpop.f32.mrb[0].mxu0
      %v1991 = vadd.f32 %v1839, %v1990
      %v1992 = vpop.f32.mrb[0].mxu0
      %1993 = vmatprep.mubr.bf16.mxu0 %v1777
      %1994 = vmatmul.mubr.bf16.gmra.mrb[0].mxu0 %v1776
      %v1995 = vpop.f32.mrb[0].mxu0
      %v1996 = vadd.f32 %v1839, %v1995
      %v1997 = vpop.f32.mrb[0].mxu0
      %v1998 = vpop.f32.mrb[0].mxu0
      %v1999 = vadd.f32 %v1839, %v1998
      %v2000 = vpop.f32.mrb[0].mxu0
      %2001 = vmatprep.mubr.bf16.mxu0 %v1779
      %2002 = vmatmul.mubr.bf16.gmra.mrb[0].mxu0 %v1778
      %v2003 = vpop.f32.mrb[0].mxu0
      %v2004 = vadd.f32 %v1839, %v2003
      %v2005 = vpop.f32.mrb[0].mxu0
      %v2006 = vpop.f32.mrb[0].mxu0
      %v2007 = vadd.f32 %v1839, %v2006
      %v2008 = vpop.f32.mrb[0].mxu0
      %2009 = vmatprep.mubr.bf16.mxu0 %v1781
      %2010 = vmatmul.mubr.bf16.gmra.mrb[0].mxu0 %v1780
      %v2011 = vpop.f32.mrb[0].mxu0
      %v2012 = vadd.f32 %v1839, %v2011
      %v2013 = vpop.f32.mrb[0].mxu0
      %v2014 = vpop.f32.mrb[0].mxu0
      %v2015 = vadd.f32 %v1839, %v2014
      %v2016 = vpop.f32.mrb[0].mxu0
      %2017 = vmatprep.mubr.bf16.mxu0 %v1783
      %2018 = vmatmul.mubr.bf16.gmra.mrb[0].mxu0 %v1782
      %v2019 = vpop.f32.mrb[0].mxu0
      %v2020 = vadd.f32 %v1839, %v2019
      %v2021 = vpop.f32.mrb[0].mxu0
      %v2022 = vpop.f32.mrb[0].mxu0
      %v2023 = vadd.f32 %v1839, %v2022
      %v2024 = vpop.f32.mrb[0].mxu0
      %2025 = vmatprep.mubr.bf16.mxu0 %v1785
      %2026 = vmatmul.mubr.bf16.gmra.mrb[0].mxu0 %v1784
      %v2027 = vpop.f32.mrb[0].mxu0
      %v2028 = vadd.f32 %v1839, %v2027
      %v2029 = vpop.f32.mrb[0].mxu0
      %v2030 = vpop.f32.mrb[0].mxu0
      %v2031 = vadd.f32 %v1839, %v2030
      %v2032 = vpop.f32.mrb[0].mxu0
      %2033 = vmatprep.mubr.bf16.mxu0 %v1787
      %2034 = vmatmul.mubr.bf16.gmra.mrb[0].mxu0 %v1786
      %v2035 = vpop.f32.mrb[0].mxu0
      %v2036 = vadd.f32 %v1839, %v2035
      %v2037 = vpop.f32.mrb[0].mxu0
      %v2038 = vpop.f32.mrb[0].mxu0
      %v2039 = vadd.f32 %v1839, %v2038
      %v2040 = vpop.f32.mrb[0].mxu0
      %2041 = vmatprep.mubr.bf16.mxu0 %v1789
      %2042 = vmatmul.mubr.bf16.gmra.mrb[0].mxu0 %v1788
      %v2043 = vpop.f32.mrb[0].mxu0
      %v2044 = vadd.f32 %v1839, %v2043
      %v2045 = vpop.f32.mrb[0].mxu0
      %v2046 = vpop.f32.mrb[0].mxu0
      %v2047 = vadd.f32 %v1839, %v2046
      %v2048 = vpop.f32.mrb[0].mxu0
      %2049 = vmatprep.mubr.bf16.mxu0 %v1791
      %2050 = vmatmul.mubr.bf16.gmra.mrb[0].mxu0 %v1790
      %v2051 = vpop.f32.mrb[0].mxu0
      %v2052 = vadd.f32 %v1839, %v2051
      %v2053 = vpop.f32.mrb[0].mxu0
      %v2054 = vpop.f32.mrb[0].mxu0
      %v2055 = vadd.f32 %v1839, %v2054
      %v2056 = vpop.f32.mrb[0].mxu0
      %2057 = vmatprep.mubr.bf16.mxu0 %v1793
      %2058 = vmatmul.mubr.bf16.gmra.mrb[0].mxu0 %v1792
      %v2059 = vpop.f32.mrb[0].mxu0
      %v2060 = vadd.f32 %v1839, %v2059
      %v2061 = vpop.f32.mrb[0].mxu0
      %v2062 = vpop.f32.mrb[0].mxu0
      %v2063 = vadd.f32 %v1839, %v2062
      %v2064 = vpop.f32.mrb[0].mxu0
      %2065 = vmatprep.mubr.bf16.mxu0 %v1795
      %2066 = vmatmul.mubr.bf16.gmra.mrb[0].mxu0 %v1794
      %v2067 = vpop.f32.mrb[0].mxu0
      %v2068 = vadd.f32 %v1839, %v2067
      %v2069 = vpop.f32.mrb[0].mxu0
      %v2070 = vpop.f32.mrb[0].mxu0
      %v2071 = vadd.f32 %v1839, %v2070
      %v2072 = vpop.f32.mrb[0].mxu0
      %2073 = vmatprep.mubr.bf16.mxu0 %v1797
      %2074 = vmatmul.mubr.bf16.gmra.mrb[0].mxu0 %v1796
      %v2075 = vpop.f32.mrb[0].mxu0
      %v2076 = vadd.f32 %v1839, %v2075
      %v2077 = vpop.f32.mrb[0].mxu0
      %v2078 = vpop.f32.mrb[0].mxu0
      %v2079 = vadd.f32 %v1839, %v2078
      %v2080 = vpop.f32.mrb[0].mxu0
      %2081 = vmatprep.mubr.bf16.mxu0 %v1799
      %2082 = vmatmul.mubr.bf16.gmra.mrb[0].mxu0 %v1798
      %v2083 = vpop.f32.mrb[0].mxu0
      %v2084 = vadd.f32 %v1839, %v2083
      %v2085 = vpop.f32.mrb[0].mxu0
      %v2086 = vpop.f32.mrb[0].mxu0
      %v2087 = vadd.f32 %v1839, %v2086
      %v2088 = vpop.f32.mrb[0].mxu0
      %2089 = vmatprep.mubr.bf16.mxu0 %v1801
      %2090 = vmatmul.mubr.bf16.gmra.mrb[0].mxu0 %v1800
      %v2091 = vpop.f32.mrb[0].mxu0
      %v2092 = vadd.f32 %v1839, %v2091
      %v2093 = vpop.f32.mrb[0].mxu0
      %v2094 = vpop.f32.mrb[0].mxu0
      %v2095 = vadd.f32 %v1839, %v2094
      %v2096 = vpop.f32.mrb[0].mxu0
      %2097 = vdwg.mxu0
      %vm2098 = vcmask 392192
      %2099 = vst.msk [vmem:[%s334] sm:$0xff] %vm2098, %v1972
      %2100 = vst.msk [vmem:[%s334 + $0x8] sm:$0xff] %vm2098, %v1975
      %2101 = vst.msk [vmem:[%s334 + $0x10] sm:$0xff] %vm2098, %v1980
      %2102 = vst.msk [vmem:[%s334 + $0x18] sm:$0xff] %vm2098, %v1983
      %2103 = vst.msk [vmem:[%s334 + $0x20] sm:$0xff] %vm2098, %v1988
      %2104 = vst.msk [vmem:[%s334 + $0x28] sm:$0xff] %vm2098, %v1991
      %2105 = vst.msk [vmem:[%s334 + $0x30] sm:$0xff] %vm2098, %v1996
      %2106 = vst.msk [vmem:[%s334 + $0x38] sm:$0xff] %vm2098, %v1999
      %2107 = vst.msk [vmem:[%s334 + $0x40] sm:$0xff] %vm2098, %v2004
      %2108 = vst.msk [vmem:[%s334 + $0x48] sm:$0xff] %vm2098, %v2007
      %2109 = vst.msk [vmem:[%s334 + $0x50] sm:$0xff] %vm2098, %v2012
      %2110 = vst.msk [vmem:[%s334 + $0x58] sm:$0xff] %vm2098, %v2015
      %2111 = vst.msk [vmem:[%s334 + $0x60] sm:$0xff] %vm2098, %v2020
      %2112 = vst.msk [vmem:[%s334 + $0x68] sm:$0xff] %vm2098, %v2023
      %2113 = vst.msk [vmem:[%s334 + $0x70] sm:$0xff] %vm2098, %v2028
      %2114 = vst.msk [vmem:[%s334 + $0x78] sm:$0xff] %vm2098, %v2031
      %2115 = vst.msk [vmem:[%s334 + $0x80] sm:$0xff] %vm2098, %v2036
      %2116 = vst.msk [vmem:[%s334 + $0x88] sm:$0xff] %vm2098, %v2039
      %2117 = vst.msk [vmem:[%s334 + $0x90] sm:$0xff] %vm2098, %v2044
      %2118 = vst.msk [vmem:[%s334 + $0x98] sm:$0xff] %vm2098, %v2047
      %2119 = vst.msk [vmem:[%s334 + $0xa0] sm:$0xff] %vm2098, %v2052
      %2120 = vst.msk [vmem:[%s334 + $0xa8] sm:$0xff] %vm2098, %v2055
      %2121 = vst.msk [vmem:[%s334 + $0xb0] sm:$0xff] %vm2098, %v2060
      %2122 = vst.msk [vmem:[%s334 + $0xb8] sm:$0xff] %vm2098, %v2063
      %2123 = vst.msk [vmem:[%s334 + $0xc0] sm:$0xff] %vm2098, %v2068
      %2124 = vst.msk [vmem:[%s334 + $0xc8] sm:$0xff] %vm2098, %v2071
      %2125 = vst.msk [vmem:[%s334 + $0xd0] sm:$0xff] %vm2098, %v2076
      %2126 = vst.msk [vmem:[%s334 + $0xd8] sm:$0xff] %vm2098, %v2079
      %2127 = vst.msk [vmem:[%s334 + $0xe0] sm:$0xff] %vm2098, %v2084
      %2128 = vst.msk [vmem:[%s334 + $0xe8] sm:$0xff] %vm2098, %v2087
      %2129 = vst.msk [vmem:[%s334 + $0xf0] sm:$0xff] %vm2098, %v2092
      %2130 = vst.msk [vmem:[%s334 + $0xf8] sm:$0xff] %vm2098, %v2095
      %s2131 = smul.u32 32, %s20
      %p2132 = scmp.lt.s32.totalorder %s2131, 63
      %s2133 = scalar_select %p2132, %s2131, 63
      %s2134 = smul.addr %s2133, 8
      %s2135 = scalar_lea.vmem %s9, %s2134
      // Predicated region
      $region57: #{tpu_custom_call.1} parent=55 // pred_check
        %p2136 = pneg %p232
      $region58: #{tpu_custom_call.1} parent=55 // pred_check_branch
        %2138 = sbr.rel (%p2136) target = $region60
      $region59: #{tpu_custom_call.1} parent=55 // pred_region
        %s2139 = smul.u32 32, %s20
      $region60: #{tpu_custom_call.1} parent=55 // pred_fallthru
        _
    $region56: #{tpu_custom_call.1} parent=5 // pred_fallthru
      _
    %p2140 = scmp.le.s32.totalorder 2, %s15
    // Predicated region
    $region61: #{tpu_custom_call.1} parent=5 // pred_check
      %p2141 = pneg %p2140
    $region62: #{tpu_custom_call.1} parent=5 // pred_check_branch
      %2143 = sbr.rel (%p2141) target = $region64
    $region63: #{tpu_custom_call.1} parent=5 // pred_region
      %s2144 = ssub.s32 %s15, 2
      // Predicated region
      $region65: #{tpu_custom_call.1} parent=63 // pred_check
        %p2145 = pneg %p238
      $region66: #{tpu_custom_call.1} parent=63 // pred_check_branch
        %2147 = sbr.rel (%p2145) target = $region68
      $region67: #{tpu_custom_call.1} parent=63 // pred_region
        %s2148 = smul.u32 32, %s21
        %p2149 = scmp.lt.s32.totalorder %s2148, 63
        %s2150 = scalar_select %p2149, %s2148, 63
        %s2151 = smul.addr %s2150, 8
        %s2152 = scalar_lea.vmem %s9, %s2151
      $region68: #{tpu_custom_call.1} parent=63 // pred_fallthru
        _
    $region64: #{tpu_custom_call.1} parent=5 // pred_fallthru
      _
  $region6: #{tpu_custom_call.1} parent=0 // loop_footer
    %s19 = sadd.s32 1, %s15
  $region7: #{tpu_custom_call.1} parent=0 // loop_footer_branch
    %14 = sbr.rel target = $region3
  $region8: #{tpu_custom_call.1} parent=0 // loop_exit
    _

</llo_original>
